<compile_context>
chip_gen: v5e
topology: v5e:2x2
jax: 0.10.0
libtpu: 0.0.40
codegen_flags: <defaults>
</compile_context>

<pallas_src>
import jax
import jax.numpy as jnp
from jax import lax
from jax.experimental import pallas as pl
from jax.experimental.pallas import tpu as pltpu

EPS = 1e-5
LANE = 128
SUB = 8
NEG = -3.0e38


def _round_up(x, m):
    return ((x + m - 1) // m) * m


# ---------------------------------------------------------------------------
# Fused Inception forward (single pallas_call, one grid step per image)
# ---------------------------------------------------------------------------
def _inception_forward(x_nchw, params):
    n, c_in, h, w = x_nchw.shape
    hp, wp = h + 2, w + 2
    mp = hp * wp                              # padded flat spatial per image
    max_shift = wp + 1                        # largest 3x3 tap offset
    off = _round_up(max_shift, LANE)          # left margin inside row buffers
    cw = _round_up(mp, LANE)                  # compute width (lane-dense)
    sw = _round_up(off + cw + max_shift, LANE)
    shifts = [(dy - 1) * wp + (dx - 1) for dy in range(3) for dx in range(3)]

    p1, p21, p22 = params["b1_1"], params["b2_1"], params["b2_2"]
    p31, p32, p33 = params["b3_1"], params["b3_2"], params["b3_3"]
    p4 = params["b4_1"]

    k1x = p1["w"].shape[0]
    k3in = p21["w"].shape[0]
    k3x = p22["w"].shape[0]
    k5in = p31["w"].shape[0]
    k5x = p33["w"].shape[0]
    cpool = p4["w"].shape[0]
    c2p = _round_up(k3in, SUB)                # padded mid channels (branch 2)
    c3p = _round_up(k5in, SUB)                # padded mid channels (branch 3a)
    c3bp = _round_up(k5x, SUB)                # padded mid channels (branch 3b)
    cm1 = c2p + c3p                           # rows of stage-1 mid buffer
    tm = max(cm1, c3bp)                       # rows of shared mid buffer
    c_out = k1x + k3x + k5x + cpool

    # ---- fold BN (inference) into conv weights / biases; lay out for kernel
    def fold_w(p):
        return p["scale"][:, None, None, None] * p["w"]            # OIHW

    def pad_rows(a, rows):
        return jnp.pad(a, ((0, rows - a.shape[0]),) + ((0, 0),) * (a.ndim - 1))

    def stack_taps(wf, cin_pad, cin_off):
        # (co, ci, 3, 3) -> (co, 9*cin_pad); column index = tap*cin_pad + ch.
        co, ci = wf.shape[0], wf.shape[1]
        wpad = jnp.pad(wf, ((0, 0), (cin_off, cin_pad - cin_off - ci),
                            (0, 0), (0, 0)))
        return jnp.transpose(wpad, (0, 2, 3, 1)).reshape(co, 9 * cin_pad)

    w_stem = jnp.concatenate(
        [fold_w(p1)[:, :, 0, 0],
         pad_rows(fold_w(p21)[:, :, 0, 0], c2p),
         pad_rows(fold_w(p31)[:, :, 0, 0], c3p)], axis=0).astype(jnp.bfloat16)
    b_stem = jnp.concatenate([p1["bias"], pad_rows(p21["bias"], c2p),
                              pad_rows(p31["bias"], c3p)])[:, None]
    w_pool = fold_w(p4)[:, :, 0, 0].astype(jnp.bfloat16)
    b_pool = p4["bias"][:, None]
    # one block weight feeding branch-2's 3x3 AND branch-3's first 3x3
    w_mid1 = jnp.concatenate([stack_taps(fold_w(p22), cm1, 0),
                              stack_taps(fold_w(p32), cm1, c2p)],
                             axis=0).astype(jnp.bfloat16)
    b_mid1 = jnp.concatenate([p22["bias"], p32["bias"]])[:, None]
    w_mid2 = stack_taps(fold_w(p33), c3bp, 0).astype(jnp.bfloat16)
    b_mid2 = p33["bias"][:, None]

    # ---- the fused kernel ----------------------------------------------------
    def kernel(x_ref, ws_ref, bs_ref, wpl_ref, bpl_ref,
               wm1_ref, bm1_ref, wm2_ref, bm2_ref,
               o_ref, xs_s, t23_s, stk_s):
        f32 = jnp.float32
        bf16 = jnp.bfloat16

        # --- in-kernel input staging into the margin / padded-flat layout.
        # Everything not covered by a real pixel stays at the -3e38 sentinel,
        # which doubles as the max-pool's -inf padding (no per-tap masking).
        xs_s[...] = jnp.full((c_in, sw), NEG, f32)
        for i in range(h):                                     # static unroll
            col = off + (i + 1) * wp + 1
            xs_s[:, col:col + w] = x_ref[:, i, :]

        # --- interior mask from iota (no mask input / DMA)
        p = lax.broadcasted_iota(jnp.int32, (1, cw), 1).astype(f32)
        prow = jnp.floor(p * (1.0 / wp))
        pcol = p - prow * wp
        m = ((prow >= 1.0) & (prow <= float(h)) &
             (pcol >= 1.0) & (pcol <= float(w)))               # (1, cw)

        x_in = jnp.where(m, xs_s[:, off:off + cw], 0.0)        # zero-padded x

        # --- fused 1x1 stem over x: [b1 | b2_1(pad) | b3_1(pad)]
        stem = jnp.dot(ws_ref[...], x_in.astype(bf16),
                       preferred_element_type=f32)
        stem = jnp.maximum(stem + bs_ref[...], 0.0)
        o_ref[0:k1x, :] = stem[0:k1x, :]                        # branch 1

        # stage-1 mid activations (t2 | t3a): zero only the margin columns,
        # the interior is a full masked overwrite.
        t23_s[:, 0:off] = jnp.zeros((tm, off), f32)
        t23_s[:, off + cw:sw] = jnp.zeros((tm, sw - off - cw), f32)
        if tm > cm1:
            t23_s[cm1:tm, off:off + cw] = jnp.zeros((tm - cm1, cw), f32)
        t23_s[0:cm1, off:off + cw] = jnp.where(m, stem[k1x:k1x + cm1, :], 0.0)

        # --- branch 4: 3x3/s1/p1 max-pool (NEG-padded source -> 9 plain
        # maxima) fused with its 1x1 conv.
        pooled = xs_s[:, off + shifts[0]:off + shifts[0] + cw]
        for s in shifts[1:]:
            pooled = jnp.maximum(pooled, xs_s[:, off + s:off + s + cw])
        pooled = jnp.where(m, pooled, 0.0)      # keep sentinels out of the dot
        y4 = jnp.dot(wpl_ref[...], pooled.astype(bf16),
                     preferred_element_type=f32)
        o_ref[k1x + k3x + k5x:c_out, :] = jnp.maximum(y4 + bpl_ref[...], 0.0)

        # --- 3x3 convs: stack the 9 shifted views along the contraction axis
        # and do ONE matmul (contraction depth 9*c_mid instead of c_mid).
        for t, s in enumerate(shifts):
            stk_s[t * cm1:(t + 1) * cm1, :] = \
                t23_s[0:cm1, off + s:off + s + cw]
        y23 = jnp.dot(wm1_ref[...], stk_s[0:9 * cm1, :].astype(bf16),
                      preferred_element_type=f32)
        y23 = jnp.maximum(y23 + bm1_ref[...], 0.0)
        o_ref[k1x:k1x + k3x, :] = y23[0:k3x, :]                 # branch 2

        # branch 3 second 3x3: reuse t23_s rows [0:c3bp) and stk_s rows
        # [0:9*c3bp) (their stage-1 lifetimes have ended).
        t23_s[0:k5x, off:off + cw] = jnp.where(m, y23[k3x:k3x + k5x, :], 0.0)
        for t, s in enumerate(shifts):
            stk_s[t * c3bp:(t + 1) * c3bp, :] = \
                t23_s[0:c3bp, off + s:off + s + cw]
        y3 = jnp.dot(wm2_ref[...], stk_s[0:9 * c3bp, :].astype(bf16),
                     preferred_element_type=f32)
        o_ref[k1x + k3x:k1x + k3x + k5x, :] = \
            jnp.maximum(y3 + bm2_ref[...], 0.0)                 # branch 3

    const_inputs = [w_stem, b_stem, w_pool, b_pool, w_mid1, b_mid1,
                    w_mid2, b_mid2]
    in_specs = [pl.BlockSpec((None, c_in, h, w), lambda b: (b, 0, 0, 0))]
    in_specs += [pl.BlockSpec(a.shape, lambda b: (0, 0)) for a in const_inputs]

    out = pl.pallas_call(
        kernel,
        out_shape=jax.ShapeDtypeStruct((n, c_out, cw), jnp.float32),
        grid=(n,),
        in_specs=in_specs,
        out_specs=pl.BlockSpec((None, c_out, cw), lambda b: (b, 0, 0)),
        scratch_shapes=[pltpu.VMEM((c_in, sw), jnp.float32),      # staged x
                        pltpu.VMEM((tm, sw), jnp.float32),        # t2|t3a / t3b
                        pltpu.VMEM((9 * tm, cw), jnp.float32)],   # stacked RHS
        compiler_params=pltpu.CompilerParams(
            dimension_semantics=("parallel",)),
    )(x_nchw, *const_inputs)

    # drop padding ring + lane tail, back to NCHW
    y = out[:, :, :mp].reshape(n, c_out, hp, wp)[:, :, 1:h + 1, 1:w + 1]
    return y


inception_forward = jax.jit(_inception_forward)


# ---------------------------------------------------------------------------
# Parameters (deterministic, synthetic)
# ---------------------------------------------------------------------------
def make_conv_bn_params(key, cin, cout, ksize):
    kw, kb, kg, kbt, km, kv = jax.random.split(key, 6)
    w = 0.1 * jax.random.normal(kw, (cout, cin, ksize, ksize), jnp.float32)  # OIHW
    b = 0.1 * jax.random.normal(kb, (cout,), jnp.float32)
    gamma = 1.0 + 0.1 * jax.random.normal(kg, (cout,), jnp.float32)
    beta = 0.1 * jax.random.normal(kbt, (cout,), jnp.float32)
    mean = 0.1 * jax.random.normal(km, (cout,), jnp.float32)
    var = 1.0 + 0.1 * jnp.abs(jax.random.normal(kv, (cout,), jnp.float32))
    scale = gamma / jnp.sqrt(var + EPS)
    bias = (b - mean) * scale + beta
    return dict(w=w, b=b, gamma=gamma, beta=beta, mean=mean, var=var,
                scale=scale, bias=bias, ksize=ksize)


def init_inception_params(key, in_planes, k1x, k3in, k3x, k5in, k5x, pool_planes):
    keys = jax.random.split(key, 7)
    return {
        "b1_1": make_conv_bn_params(keys[0], in_planes, k1x, 1),
        "b2_1": make_conv_bn_params(keys[1], in_planes, k3in, 1),
        "b2_2": make_conv_bn_params(keys[2], k3in, k3x, 3),
        "b3_1": make_conv_bn_params(keys[3], in_planes, k5in, 1),
        "b3_2": make_conv_bn_params(keys[4], k5in, k5x, 3),
        "b3_3": make_conv_bn_params(keys[5], k5x, k5x, 3),
        "b4_1": make_conv_bn_params(keys[6], in_planes, pool_planes, 1),
    }


# ---------------------------------------------------------------------------
# Pure-JAX reference (correctness check only)
# ---------------------------------------------------------------------------
def _ref_conv_bn_relu(x, p, pad):
    y = lax.conv_general_dilated(
        x, p["w"], window_strides=(1, 1), padding=[(pad, pad), (pad, pad)],
        dimension_numbers=("NCHW", "OIHW", "NCHW"))
    y = y + p["b"].reshape(1, -1, 1, 1)
    inv = (p["gamma"] / jnp.sqrt(p["var"] + EPS)).reshape(1, -1, 1, 1)
    y = (y - p["mean"].reshape(1, -1, 1, 1)) * inv + p["beta"].reshape(1, -1, 1, 1)
    return jnp.maximum(y, 0.0)


def _ref_maxpool(x):
    return lax.reduce_window(x, -jnp.inf, lax.max, (1, 1, 3, 3), (1, 1, 1, 1),
                             [(0, 0), (0, 0), (1, 1), (1, 1)])


def inception_reference(x, params):
    y1 = _ref_conv_bn_relu(x, params["b1_1"], 0)
    t = _ref_conv_bn_relu(x, params["b2_1"], 0)
    y2 = _ref_conv_bn_relu(t, params["b2_2"], 1)
    t = _ref_conv_bn_relu(x, params["b3_1"], 0)
    t = _ref_conv_bn_relu(t, params["b3_2"], 1)
    y3 = _ref_conv_bn_relu(t, params["b3_3"], 1)
    y4 = _ref_conv_bn_relu(_ref_maxpool(x), params["b4_1"], 0)
    return jnp.concatenate([y1, y2, y3, y4], axis=1)


# ---------------------------------------------------------------------------
if __name__ == "__main__":
    key = jax.random.PRNGKey(0)
    k_param, k_x = jax.random.split(key)

    # Inception(in_planes=4, kernel_1_x=8, kernel_3_in=4, kernel_3_x=8,
    #           kernel_5_in=4, kernel_5_x=8, pool_planes=8)
    in_planes, k1x, k3in, k3x, k5in, k5x, pool_planes = 4, 8, 4, 8, 4, 8, 8
    params = init_inception_params(k_param, in_planes, k1x, k3in, k3x,
                                   k5in, k5x, pool_planes)

    N, H, W = 2, 16, 16
    x = jax.random.normal(k_x, (N, in_planes, H, W), jnp.float32)

    out = inception_forward(x, params)
    out = jax.block_until_ready(out)
    assert out.shape == (N, k1x + k3x + k5x + pool_planes, H, W), out.shape

    ref = jax.block_until_ready(inception_reference(x, params))
    # bf16 MXU operands with f32 accumulation -> slightly looser tolerance
    assert jnp.allclose(out, ref, atol=2e-2, rtol=2e-2), \
        f"max abs diff {jnp.max(jnp.abs(out - ref))}"

    print("KERNEL_OK")
</pallas_src>

<mosaic_0001>
module attributes {stable_mosaic.version = 11 : i64} {
  func.func @kernel(%arg0: i32, %arg1: memref<1x4x16x16xf32, #tpu.memory_space<vmem>>, %arg2: memref<24x4xbf16, #tpu.memory_space<vmem>>, %arg3: memref<24x1xf32, #tpu.memory_space<vmem>>, %arg4: memref<8x4xbf16, #tpu.memory_space<vmem>>, %arg5: memref<8x1xf32, #tpu.memory_space<vmem>>, %arg6: memref<16x144xbf16, #tpu.memory_space<vmem>>, %arg7: memref<16x1xf32, #tpu.memory_space<vmem>>, %arg8: memref<8x72xbf16, #tpu.memory_space<vmem>>, %arg9: memref<8x1xf32, #tpu.memory_space<vmem>>, %arg10: memref<1x32x384xf32, #tpu.memory_space<vmem>>, %arg11: memref<4x640xf32, #tpu.memory_space<vmem>>, %arg12: memref<16x640xf32, #tpu.memory_space<vmem>>, %arg13: memref<144x384xf32, #tpu.memory_space<vmem>>) attributes {dimension_semantics = [#tpu.dimension_semantics<parallel>], iteration_bounds = array<i64: 2>, scalar_prefetch = 0 : i64, scratch_operands = 3 : i64, tpu.core_type = #tpu.core_type<tc>, window_params = [{transform_indices = @transform_0, window_bounds = array<i64: 1, 4, 16, 16>}, {pipeline_mode = #tpu.pipeline_mode<synchronous>, transform_indices = @transform_1, window_bounds = array<i64: 24, 4>}, {pipeline_mode = #tpu.pipeline_mode<synchronous>, transform_indices = @transform_2, window_bounds = array<i64: 24, 1>}, {pipeline_mode = #tpu.pipeline_mode<synchronous>, transform_indices = @transform_3, window_bounds = array<i64: 8, 4>}, {pipeline_mode = #tpu.pipeline_mode<synchronous>, transform_indices = @transform_4, window_bounds = array<i64: 8, 1>}, {pipeline_mode = #tpu.pipeline_mode<synchronous>, transform_indices = @transform_5, window_bounds = array<i64: 16, 144>}, {pipeline_mode = #tpu.pipeline_mode<synchronous>, transform_indices = @transform_6, window_bounds = array<i64: 16, 1>}, {pipeline_mode = #tpu.pipeline_mode<synchronous>, transform_indices = @transform_7, window_bounds = array<i64: 8, 72>}, {pipeline_mode = #tpu.pipeline_mode<synchronous>, transform_indices = @transform_8, window_bounds = array<i64: 8, 1>}, {transform_indices = @transform_9, window_bounds = array<i64: 1, 32, 384>}]} {
    %cst = arith.constant -3.000000e+38 : f32
    %0 = vector.broadcast %cst : f32 to vector<4x640xf32>
    %c0 = arith.constant 0 : index
    %c0_0 = arith.constant 0 : index
    %1 = vector.load %arg11[%c0, %c0_0] : memref<4x640xf32, #tpu.memory_space<vmem>>, vector<4x640xf32>
    tpu.vector_store %arg11[%c0, %c0_0], %0 {strides = array<i32>} : memref<4x640xf32, #tpu.memory_space<vmem>>, vector<4x640xf32>,
    %c0_1 = arith.constant 0 : index
    %c0_2 = arith.constant 0 : index
    %c0_3 = arith.constant 0 : index
    %c0_4 = arith.constant 0 : index
    %2 = vector.load %arg1[%c0_1, %c0_2, %c0_3, %c0_4] : memref<1x4x16x16xf32, #tpu.memory_space<vmem>>, vector<1x4x1x16xf32>
    %3 = vector.shape_cast %2 : vector<1x4x1x16xf32> to vector<4x16xf32>
    %c0_5 = arith.constant 0 : index
    %c147 = arith.constant 147 : index
    %4 = vector.load %arg11[%c0_5, %c147] : memref<4x640xf32, #tpu.memory_space<vmem>>, vector<4x16xf32>
    tpu.vector_store %arg11[%c0_5, %c147], %3 {strides = array<i32>} : memref<4x640xf32, #tpu.memory_space<vmem>>, vector<4x16xf32>,
    %c0_6 = arith.constant 0 : index
    %c0_7 = arith.constant 0 : index
    %c1 = arith.constant 1 : index
    %c0_8 = arith.constant 0 : index
    %5 = vector.load %arg1[%c0_6, %c0_7, %c1, %c0_8] : memref<1x4x16x16xf32, #tpu.memory_space<vmem>>, vector<1x4x1x16xf32>
    %6 = vector.shape_cast %5 : vector<1x4x1x16xf32> to vector<4x16xf32>
    %c0_9 = arith.constant 0 : index
    %c165 = arith.constant 165 : index
    %7 = vector.load %arg11[%c0_9, %c165] : memref<4x640xf32, #tpu.memory_space<vmem>>, vector<4x16xf32>
    tpu.vector_store %arg11[%c0_9, %c165], %6 {strides = array<i32>} : memref<4x640xf32, #tpu.memory_space<vmem>>, vector<4x16xf32>,
    %c0_10 = arith.constant 0 : index
    %c0_11 = arith.constant 0 : index
    %c2 = arith.constant 2 : index
    %c0_12 = arith.constant 0 : index
    %8 = vector.load %arg1[%c0_10, %c0_11, %c2, %c0_12] : memref<1x4x16x16xf32, #tpu.memory_space<vmem>>, vector<1x4x1x16xf32>
    %9 = vector.shape_cast %8 : vector<1x4x1x16xf32> to vector<4x16xf32>
    %c0_13 = arith.constant 0 : index
    %c183 = arith.constant 183 : index
    %10 = vector.load %arg11[%c0_13, %c183] : memref<4x640xf32, #tpu.memory_space<vmem>>, vector<4x16xf32>
    tpu.vector_store %arg11[%c0_13, %c183], %9 {strides = array<i32>} : memref<4x640xf32, #tpu.memory_space<vmem>>, vector<4x16xf32>,
    %c0_14 = arith.constant 0 : index
    %c0_15 = arith.constant 0 : index
    %c3 = arith.constant 3 : index
    %c0_16 = arith.constant 0 : index
    %11 = vector.load %arg1[%c0_14, %c0_15, %c3, %c0_16] : memref<1x4x16x16xf32, #tpu.memory_space<vmem>>, vector<1x4x1x16xf32>
    %12 = vector.shape_cast %11 : vector<1x4x1x16xf32> to vector<4x16xf32>
    %c0_17 = arith.constant 0 : index
    %c201 = arith.constant 201 : index
    %13 = vector.load %arg11[%c0_17, %c201] : memref<4x640xf32, #tpu.memory_space<vmem>>, vector<4x16xf32>
    tpu.vector_store %arg11[%c0_17, %c201], %12 {strides = array<i32>} : memref<4x640xf32, #tpu.memory_space<vmem>>, vector<4x16xf32>,
    %c0_18 = arith.constant 0 : index
    %c0_19 = arith.constant 0 : index
    %c4 = arith.constant 4 : index
    %c0_20 = arith.constant 0 : index
    %14 = vector.load %arg1[%c0_18, %c0_19, %c4, %c0_20] : memref<1x4x16x16xf32, #tpu.memory_space<vmem>>, vector<1x4x1x16xf32>
    %15 = vector.shape_cast %14 : vector<1x4x1x16xf32> to vector<4x16xf32>
    %c0_21 = arith.constant 0 : index
    %c219 = arith.constant 219 : index
    %16 = vector.load %arg11[%c0_21, %c219] : memref<4x640xf32, #tpu.memory_space<vmem>>, vector<4x16xf32>
    tpu.vector_store %arg11[%c0_21, %c219], %15 {strides = array<i32>} : memref<4x640xf32, #tpu.memory_space<vmem>>, vector<4x16xf32>,
    %c0_22 = arith.constant 0 : index
    %c0_23 = arith.constant 0 : index
    %c5 = arith.constant 5 : index
    %c0_24 = arith.constant 0 : index
    %17 = vector.load %arg1[%c0_22, %c0_23, %c5, %c0_24] : memref<1x4x16x16xf32, #tpu.memory_space<vmem>>, vector<1x4x1x16xf32>
    %18 = vector.shape_cast %17 : vector<1x4x1x16xf32> to vector<4x16xf32>
    %c0_25 = arith.constant 0 : index
    %c237 = arith.constant 237 : index
    %19 = vector.load %arg11[%c0_25, %c237] : memref<4x640xf32, #tpu.memory_space<vmem>>, vector<4x16xf32>
    tpu.vector_store %arg11[%c0_25, %c237], %18 {strides = array<i32>} : memref<4x640xf32, #tpu.memory_space<vmem>>, vector<4x16xf32>,
    %c0_26 = arith.constant 0 : index
    %c0_27 = arith.constant 0 : index
    %c6 = arith.constant 6 : index
    %c0_28 = arith.constant 0 : index
    %20 = vector.load %arg1[%c0_26, %c0_27, %c6, %c0_28] : memref<1x4x16x16xf32, #tpu.memory_space<vmem>>, vector<1x4x1x16xf32>
    %21 = vector.shape_cast %20 : vector<1x4x1x16xf32> to vector<4x16xf32>
    %c0_29 = arith.constant 0 : index
    %c255 = arith.constant 255 : index
    %22 = vector.load %arg11[%c0_29, %c255] : memref<4x640xf32, #tpu.memory_space<vmem>>, vector<4x16xf32>
    tpu.vector_store %arg11[%c0_29, %c255], %21 {strides = array<i32>} : memref<4x640xf32, #tpu.memory_space<vmem>>, vector<4x16xf32>,
    %c0_30 = arith.constant 0 : index
    %c0_31 = arith.constant 0 : index
    %c7 = arith.constant 7 : index
    %c0_32 = arith.constant 0 : index
    %23 = vector.load %arg1[%c0_30, %c0_31, %c7, %c0_32] : memref<1x4x16x16xf32, #tpu.memory_space<vmem>>, vector<1x4x1x16xf32>
    %24 = vector.shape_cast %23 : vector<1x4x1x16xf32> to vector<4x16xf32>
    %c0_33 = arith.constant 0 : index
    %c273 = arith.constant 273 : index
    %25 = vector.load %arg11[%c0_33, %c273] : memref<4x640xf32, #tpu.memory_space<vmem>>, vector<4x16xf32>
    tpu.vector_store %arg11[%c0_33, %c273], %24 {strides = array<i32>} : memref<4x640xf32, #tpu.memory_space<vmem>>, vector<4x16xf32>,
    %c0_34 = arith.constant 0 : index
    %c0_35 = arith.constant 0 : index
    %c8 = arith.constant 8 : index
    %c0_36 = arith.constant 0 : index
    %26 = vector.load %arg1[%c0_34, %c0_35, %c8, %c0_36] : memref<1x4x16x16xf32, #tpu.memory_space<vmem>>, vector<1x4x1x16xf32>
    %27 = vector.shape_cast %26 : vector<1x4x1x16xf32> to vector<4x16xf32>
    %c0_37 = arith.constant 0 : index
    %c291 = arith.constant 291 : index
    %28 = vector.load %arg11[%c0_37, %c291] : memref<4x640xf32, #tpu.memory_space<vmem>>, vector<4x16xf32>
    tpu.vector_store %arg11[%c0_37, %c291], %27 {strides = array<i32>} : memref<4x640xf32, #tpu.memory_space<vmem>>, vector<4x16xf32>,
    %c0_38 = arith.constant 0 : index
    %c0_39 = arith.constant 0 : index
    %c9 = arith.constant 9 : index
    %c0_40 = arith.constant 0 : index
    %29 = vector.load %arg1[%c0_38, %c0_39, %c9, %c0_40] : memref<1x4x16x16xf32, #tpu.memory_space<vmem>>, vector<1x4x1x16xf32>
    %30 = vector.shape_cast %29 : vector<1x4x1x16xf32> to vector<4x16xf32>
    %c0_41 = arith.constant 0 : index
    %c309 = arith.constant 309 : index
    %31 = vector.load %arg11[%c0_41, %c309] : memref<4x640xf32, #tpu.memory_space<vmem>>, vector<4x16xf32>
    tpu.vector_store %arg11[%c0_41, %c309], %30 {strides = array<i32>} : memref<4x640xf32, #tpu.memory_space<vmem>>, vector<4x16xf32>,
    %c0_42 = arith.constant 0 : index
    %c0_43 = arith.constant 0 : index
    %c10 = arith.constant 10 : index
    %c0_44 = arith.constant 0 : index
    %32 = vector.load %arg1[%c0_42, %c0_43, %c10, %c0_44] : memref<1x4x16x16xf32, #tpu.memory_space<vmem>>, vector<1x4x1x16xf32>
    %33 = vector.shape_cast %32 : vector<1x4x1x16xf32> to vector<4x16xf32>
    %c0_45 = arith.constant 0 : index
    %c327 = arith.constant 327 : index
    %34 = vector.load %arg11[%c0_45, %c327] : memref<4x640xf32, #tpu.memory_space<vmem>>, vector<4x16xf32>
    tpu.vector_store %arg11[%c0_45, %c327], %33 {strides = array<i32>} : memref<4x640xf32, #tpu.memory_space<vmem>>, vector<4x16xf32>,
    %c0_46 = arith.constant 0 : index
    %c0_47 = arith.constant 0 : index
    %c11 = arith.constant 11 : index
    %c0_48 = arith.constant 0 : index
    %35 = vector.load %arg1[%c0_46, %c0_47, %c11, %c0_48] : memref<1x4x16x16xf32, #tpu.memory_space<vmem>>, vector<1x4x1x16xf32>
    %36 = vector.shape_cast %35 : vector<1x4x1x16xf32> to vector<4x16xf32>
    %c0_49 = arith.constant 0 : index
    %c345 = arith.constant 345 : index
    %37 = vector.load %arg11[%c0_49, %c345] : memref<4x640xf32, #tpu.memory_space<vmem>>, vector<4x16xf32>
    tpu.vector_store %arg11[%c0_49, %c345], %36 {strides = array<i32>} : memref<4x640xf32, #tpu.memory_space<vmem>>, vector<4x16xf32>,
    %c0_50 = arith.constant 0 : index
    %c0_51 = arith.constant 0 : index
    %c12 = arith.constant 12 : index
    %c0_52 = arith.constant 0 : index
    %38 = vector.load %arg1[%c0_50, %c0_51, %c12, %c0_52] : memref<1x4x16x16xf32, #tpu.memory_space<vmem>>, vector<1x4x1x16xf32>
    %39 = vector.shape_cast %38 : vector<1x4x1x16xf32> to vector<4x16xf32>
    %c0_53 = arith.constant 0 : index
    %c363 = arith.constant 363 : index
    %40 = vector.load %arg11[%c0_53, %c363] : memref<4x640xf32, #tpu.memory_space<vmem>>, vector<4x16xf32>
    tpu.vector_store %arg11[%c0_53, %c363], %39 {strides = array<i32>} : memref<4x640xf32, #tpu.memory_space<vmem>>, vector<4x16xf32>,
    %c0_54 = arith.constant 0 : index
    %c0_55 = arith.constant 0 : index
    %c13 = arith.constant 13 : index
    %c0_56 = arith.constant 0 : index
    %41 = vector.load %arg1[%c0_54, %c0_55, %c13, %c0_56] : memref<1x4x16x16xf32, #tpu.memory_space<vmem>>, vector<1x4x1x16xf32>
    %42 = vector.shape_cast %41 : vector<1x4x1x16xf32> to vector<4x16xf32>
    %c0_57 = arith.constant 0 : index
    %c381 = arith.constant 381 : index
    %43 = vector.load %arg11[%c0_57, %c381] : memref<4x640xf32, #tpu.memory_space<vmem>>, vector<4x16xf32>
    tpu.vector_store %arg11[%c0_57, %c381], %42 {strides = array<i32>} : memref<4x640xf32, #tpu.memory_space<vmem>>, vector<4x16xf32>,
    %c0_58 = arith.constant 0 : index
    %c0_59 = arith.constant 0 : index
    %c14 = arith.constant 14 : index
    %c0_60 = arith.constant 0 : index
    %44 = vector.load %arg1[%c0_58, %c0_59, %c14, %c0_60] : memref<1x4x16x16xf32, #tpu.memory_space<vmem>>, vector<1x4x1x16xf32>
    %45 = vector.shape_cast %44 : vector<1x4x1x16xf32> to vector<4x16xf32>
    %c0_61 = arith.constant 0 : index
    %c399 = arith.constant 399 : index
    %46 = vector.load %arg11[%c0_61, %c399] : memref<4x640xf32, #tpu.memory_space<vmem>>, vector<4x16xf32>
    tpu.vector_store %arg11[%c0_61, %c399], %45 {strides = array<i32>} : memref<4x640xf32, #tpu.memory_space<vmem>>, vector<4x16xf32>,
    %c0_62 = arith.constant 0 : index
    %c0_63 = arith.constant 0 : index
    %c15 = arith.constant 15 : index
    %c0_64 = arith.constant 0 : index
    %47 = vector.load %arg1[%c0_62, %c0_63, %c15, %c0_64] : memref<1x4x16x16xf32, #tpu.memory_space<vmem>>, vector<1x4x1x16xf32>
    %48 = vector.shape_cast %47 : vector<1x4x1x16xf32> to vector<4x16xf32>
    %c0_65 = arith.constant 0 : index
    %c417 = arith.constant 417 : index
    %49 = vector.load %arg11[%c0_65, %c417] : memref<4x640xf32, #tpu.memory_space<vmem>>, vector<4x16xf32>
    tpu.vector_store %arg11[%c0_65, %c417], %48 {strides = array<i32>} : memref<4x640xf32, #tpu.memory_space<vmem>>, vector<4x16xf32>,
    %50 = tpu.iota {dimensions = array<i32: 1>} : vector<1x384xi32>
    %51 = arith.sitofp %50 : vector<1x384xi32> to vector<1x384xf32>
    %cst_66 = arith.constant 0.055555556 : f32
    %52 = vector.broadcast %cst_66 : f32 to vector<1x384xf32>
    %53 = arith.mulf %51, %52 : vector<1x384xf32>
    %54 = math.floor %53 : vector<1x384xf32>
    %cst_67 = arith.constant 1.800000e+01 : f32
    %55 = vector.broadcast %cst_67 : f32 to vector<1x384xf32>
    %56 = arith.mulf %54, %55 : vector<1x384xf32>
    %57 = arith.subf %51, %56 : vector<1x384xf32>
    %cst_68 = arith.constant 1.000000e+00 : f32
    %58 = vector.broadcast %cst_68 : f32 to vector<1x384xf32>
    %59 = arith.cmpf oge, %54, %58 : vector<1x384xf32>
    %cst_69 = arith.constant 1.600000e+01 : f32
    %60 = vector.broadcast %cst_69 : f32 to vector<1x384xf32>
    %61 = arith.cmpf ole, %54, %60 : vector<1x384xf32>
    %62 = arith.andi %59, %61 : vector<1x384xi1>
    %cst_70 = arith.constant 1.000000e+00 : f32
    %63 = vector.broadcast %cst_70 : f32 to vector<1x384xf32>
    %64 = arith.cmpf oge, %57, %63 : vector<1x384xf32>
    %65 = arith.andi %62, %64 : vector<1x384xi1>
    %cst_71 = arith.constant 1.600000e+01 : f32
    %66 = vector.broadcast %cst_71 : f32 to vector<1x384xf32>
    %67 = arith.cmpf ole, %57, %66 : vector<1x384xf32>
    %68 = arith.andi %65, %67 : vector<1x384xi1>
    %c0_72 = arith.constant 0 : index
    %c128 = arith.constant 128 : index
    %69 = vector.load %arg11[%c0_72, %c128] : memref<4x640xf32, #tpu.memory_space<vmem>>, vector<4x384xf32>
    %cst_73 = arith.constant 0.000000e+00 : f32
    %70 = vector.shape_cast %68 : vector<1x384xi1> to vector<1x384xi1>
    %71 = vector.broadcast %70 : vector<1x384xi1> to vector<4x384xi1>
    %72 = vector.broadcast %cst_73 : f32 to vector<4x384xf32>
    %73 = arith.select %71, %69, %72 : vector<4x384xi1>, vector<4x384xf32>
    %c0_74 = arith.constant 0 : index
    %c0_75 = arith.constant 0 : index
    %74 = vector.load %arg2[%c0_74, %c0_75] : memref<24x4xbf16, #tpu.memory_space<vmem>>, vector<24x4xbf16>
    %75 = arith.truncf %73 : vector<4x384xf32> to vector<4x384xbf16>
    %cst_76 = arith.constant dense<0.000000e+00> : vector<24x384xf32>
    %76 = tpu.matmul %74, %75, %cst_76 {dimension_numbers = #tpu.dot_dimension_numbers<[1], [0], [0], [1], [0, 0, 1, 1], [], []>} : vector<24x4xbf16>, vector<4x384xbf16>, vector<24x384xf32> -> vector<24x384xf32>
    %c0_77 = arith.constant 0 : index
    %c0_78 = arith.constant 0 : index
    %77 = vector.load %arg3[%c0_77, %c0_78] : memref<24x1xf32, #tpu.memory_space<vmem>>, vector<24x1xf32>
    %78 = vector.broadcast %77 : vector<24x1xf32> to vector<24x384xf32>
    %79 = arith.addf %76, %78 : vector<24x384xf32>
    %cst_79 = arith.constant 0.000000e+00 : f32
    %80 = vector.broadcast %cst_79 : f32 to vector<24x384xf32>
    %81 = arith.maximumf %79, %80 : vector<24x384xf32>
    %82 = vector.extract_strided_slice %81 {offsets = [0, 0], sizes = [8, 384], strides = [1, 1]} : vector<24x384xf32> to vector<8x384xf32>
    %c0_80 = arith.constant 0 : index
    %c0_81 = arith.constant 0 : index
    %c0_82 = arith.constant 0 : index
    %83 = vector.load %arg10[%c0_80, %c0_81, %c0_82] : memref<1x32x384xf32, #tpu.memory_space<vmem>>, vector<1x8x384xf32>
    %84 = vector.shape_cast %83 : vector<1x8x384xf32> to vector<8x384xf32>
    %85 = vector.shape_cast %82 : vector<8x384xf32> to vector<1x8x384xf32>
    tpu.vector_store %arg10[%c0_80, %c0_81, %c0_82], %85 {strides = array<i32>} : memref<1x32x384xf32, #tpu.memory_space<vmem>>, vector<1x8x384xf32>,
    %cst_83 = arith.constant 0.000000e+00 : f32
    %86 = vector.broadcast %cst_83 : f32 to vector<16x128xf32>
    %c0_84 = arith.constant 0 : index
    %c0_85 = arith.constant 0 : index
    %87 = vector.load %arg12[%c0_84, %c0_85] : memref<16x640xf32, #tpu.memory_space<vmem>>, vector<16x128xf32>
    tpu.vector_store %arg12[%c0_84, %c0_85], %86 {strides = array<i32>} : memref<16x640xf32, #tpu.memory_space<vmem>>, vector<16x128xf32>,
    %cst_86 = arith.constant 0.000000e+00 : f32
    %88 = vector.broadcast %cst_86 : f32 to vector<16x128xf32>
    %c0_87 = arith.constant 0 : index
    %c512 = arith.constant 512 : index
    %89 = vector.load %arg12[%c0_87, %c512] : memref<16x640xf32, #tpu.memory_space<vmem>>, vector<16x128xf32>
    tpu.vector_store %arg12[%c0_87, %c512], %88 {strides = array<i32>} : memref<16x640xf32, #tpu.memory_space<vmem>>, vector<16x128xf32>,
    %90 = vector.extract_strided_slice %81 {offsets = [8, 0], sizes = [16, 384], strides = [1, 1]} : vector<24x384xf32> to vector<16x384xf32>
    %cst_88 = arith.constant 0.000000e+00 : f32
    %91 = vector.shape_cast %68 : vector<1x384xi1> to vector<1x384xi1>
    %92 = vector.broadcast %91 : vector<1x384xi1> to vector<16x384xi1>
    %93 = vector.broadcast %cst_88 : f32 to vector<16x384xf32>
    %94 = arith.select %92, %90, %93 : vector<16x384xi1>, vector<16x384xf32>
    %c0_89 = arith.constant 0 : index
    %c128_90 = arith.constant 128 : index
    %95 = vector.load %arg12[%c0_89, %c128_90] : memref<16x640xf32, #tpu.memory_space<vmem>>, vector<16x384xf32>
    tpu.vector_store %arg12[%c0_89, %c128_90], %94 {strides = array<i32>} : memref<16x640xf32, #tpu.memory_space<vmem>>, vector<16x384xf32>,
    %c0_91 = arith.constant 0 : index
    %c109 = arith.constant 109 : index
    %96 = vector.load %arg11[%c0_91, %c109] : memref<4x640xf32, #tpu.memory_space<vmem>>, vector<4x384xf32>
    %c0_92 = arith.constant 0 : index
    %c110 = arith.constant 110 : index
    %97 = vector.load %arg11[%c0_92, %c110] : memref<4x640xf32, #tpu.memory_space<vmem>>, vector<4x384xf32>
    %98 = arith.maximumf %96, %97 : vector<4x384xf32>
    %c0_93 = arith.constant 0 : index
    %c111 = arith.constant 111 : index
    %99 = vector.load %arg11[%c0_93, %c111] : memref<4x640xf32, #tpu.memory_space<vmem>>, vector<4x384xf32>
    %100 = arith.maximumf %98, %99 : vector<4x384xf32>
    %c0_94 = arith.constant 0 : index
    %c127 = arith.constant 127 : index
    %101 = vector.load %arg11[%c0_94, %c127] : memref<4x640xf32, #tpu.memory_space<vmem>>, vector<4x384xf32>
    %102 = arith.maximumf %100, %101 : vector<4x384xf32>
    %c0_95 = arith.constant 0 : index
    %c128_96 = arith.constant 128 : index
    %103 = vector.load %arg11[%c0_95, %c128_96] : memref<4x640xf32, #tpu.memory_space<vmem>>, vector<4x384xf32>
    %104 = arith.maximumf %102, %103 : vector<4x384xf32>
    %c0_97 = arith.constant 0 : index
    %c129 = arith.constant 129 : index
    %105 = vector.load %arg11[%c0_97, %c129] : memref<4x640xf32, #tpu.memory_space<vmem>>, vector<4x384xf32>
    %106 = arith.maximumf %104, %105 : vector<4x384xf32>
    %c0_98 = arith.constant 0 : index
    %c145 = arith.constant 145 : index
    %107 = vector.load %arg11[%c0_98, %c145] : memref<4x640xf32, #tpu.memory_space<vmem>>, vector<4x384xf32>
    %108 = arith.maximumf %106, %107 : vector<4x384xf32>
    %c0_99 = arith.constant 0 : index
    %c146 = arith.constant 146 : index
    %109 = vector.load %arg11[%c0_99, %c146] : memref<4x640xf32, #tpu.memory_space<vmem>>, vector<4x384xf32>
    %110 = arith.maximumf %108, %109 : vector<4x384xf32>
    %c0_100 = arith.constant 0 : index
    %c147_101 = arith.constant 147 : index
    %111 = vector.load %arg11[%c0_100, %c147_101] : memref<4x640xf32, #tpu.memory_space<vmem>>, vector<4x384xf32>
    %112 = arith.maximumf %110, %111 : vector<4x384xf32>
    %cst_102 = arith.constant 0.000000e+00 : f32
    %113 = vector.shape_cast %68 : vector<1x384xi1> to vector<1x384xi1>
    %114 = vector.broadcast %113 : vector<1x384xi1> to vector<4x384xi1>
    %115 = vector.broadcast %cst_102 : f32 to vector<4x384xf32>
    %116 = arith.select %114, %112, %115 : vector<4x384xi1>, vector<4x384xf32>
    %c0_103 = arith.constant 0 : index
    %c0_104 = arith.constant 0 : index
    %117 = vector.load %arg4[%c0_103, %c0_104] : memref<8x4xbf16, #tpu.memory_space<vmem>>, vector<8x4xbf16>
    %118 = arith.truncf %116 : vector<4x384xf32> to vector<4x384xbf16>
    %cst_105 = arith.constant dense<0.000000e+00> : vector<8x384xf32>
    %119 = tpu.matmul %117, %118, %cst_105 {dimension_numbers = #tpu.dot_dimension_numbers<[1], [0], [0], [1], [0, 0, 1, 1], [], []>} : vector<8x4xbf16>, vector<4x384xbf16>, vector<8x384xf32> -> vector<8x384xf32>
    %c0_106 = arith.constant 0 : index
    %c0_107 = arith.constant 0 : index
    %120 = vector.load %arg5[%c0_106, %c0_107] : memref<8x1xf32, #tpu.memory_space<vmem>>, vector<8x1xf32>
    %121 = vector.broadcast %120 : vector<8x1xf32> to vector<8x384xf32>
    %122 = arith.addf %119, %121 : vector<8x384xf32>
    %cst_108 = arith.constant 0.000000e+00 : f32
    %123 = vector.broadcast %cst_108 : f32 to vector<8x384xf32>
    %124 = arith.maximumf %122, %123 : vector<8x384xf32>
    %c0_109 = arith.constant 0 : index
    %c24 = arith.constant 24 : index
    %c0_110 = arith.constant 0 : index
    %125 = vector.load %arg10[%c0_109, %c24, %c0_110] : memref<1x32x384xf32, #tpu.memory_space<vmem>>, vector<1x8x384xf32>
    %126 = vector.shape_cast %125 : vector<1x8x384xf32> to vector<8x384xf32>
    %127 = vector.shape_cast %124 : vector<8x384xf32> to vector<1x8x384xf32>
    tpu.vector_store %arg10[%c0_109, %c24, %c0_110], %127 {strides = array<i32>} : memref<1x32x384xf32, #tpu.memory_space<vmem>>, vector<1x8x384xf32>,
    %c0_111 = arith.constant 0 : index
    %c109_112 = arith.constant 109 : index
    %128 = vector.load %arg12[%c0_111, %c109_112] : memref<16x640xf32, #tpu.memory_space<vmem>>, vector<16x384xf32>
    %c0_113 = arith.constant 0 : index
    %c0_114 = arith.constant 0 : index
    %129 = vector.load %arg13[%c0_113, %c0_114] : memref<144x384xf32, #tpu.memory_space<vmem>>, vector<16x384xf32>
    tpu.vector_store %arg13[%c0_113, %c0_114], %128 {strides = array<i32>} : memref<144x384xf32, #tpu.memory_space<vmem>>, vector<16x384xf32>,
    %c0_115 = arith.constant 0 : index
    %c110_116 = arith.constant 110 : index
    %130 = vector.load %arg12[%c0_115, %c110_116] : memref<16x640xf32, #tpu.memory_space<vmem>>, vector<16x384xf32>
    %c16 = arith.constant 16 : index
    %c0_117 = arith.constant 0 : index
    %131 = vector.load %arg13[%c16, %c0_117] : memref<144x384xf32, #tpu.memory_space<vmem>>, vector<16x384xf32>
    tpu.vector_store %arg13[%c16, %c0_117], %130 {strides = array<i32>} : memref<144x384xf32, #tpu.memory_space<vmem>>, vector<16x384xf32>,
    %c0_118 = arith.constant 0 : index
    %c111_119 = arith.constant 111 : index
    %132 = vector.load %arg12[%c0_118, %c111_119] : memref<16x640xf32, #tpu.memory_space<vmem>>, vector<16x384xf32>
    %c32 = arith.constant 32 : index
    %c0_120 = arith.constant 0 : index
    %133 = vector.load %arg13[%c32, %c0_120] : memref<144x384xf32, #tpu.memory_space<vmem>>, vector<16x384xf32>
    tpu.vector_store %arg13[%c32, %c0_120], %132 {strides = array<i32>} : memref<144x384xf32, #tpu.memory_space<vmem>>, vector<16x384xf32>,
    %c0_121 = arith.constant 0 : index
    %c127_122 = arith.constant 127 : index
    %134 = vector.load %arg12[%c0_121, %c127_122] : memref<16x640xf32, #tpu.memory_space<vmem>>, vector<16x384xf32>
    %c48 = arith.constant 48 : index
    %c0_123 = arith.constant 0 : index
    %135 = vector.load %arg13[%c48, %c0_123] : memref<144x384xf32, #tpu.memory_space<vmem>>, vector<16x384xf32>
    tpu.vector_store %arg13[%c48, %c0_123], %134 {strides = array<i32>} : memref<144x384xf32, #tpu.memory_space<vmem>>, vector<16x384xf32>,
    %c0_124 = arith.constant 0 : index
    %c128_125 = arith.constant 128 : index
    %136 = vector.load %arg12[%c0_124, %c128_125] : memref<16x640xf32, #tpu.memory_space<vmem>>, vector<16x384xf32>
    %c64 = arith.constant 64 : index
    %c0_126 = arith.constant 0 : index
    %137 = vector.load %arg13[%c64, %c0_126] : memref<144x384xf32, #tpu.memory_space<vmem>>, vector<16x384xf32>
    tpu.vector_store %arg13[%c64, %c0_126], %136 {strides = array<i32>} : memref<144x384xf32, #tpu.memory_space<vmem>>, vector<16x384xf32>,
    %c0_127 = arith.constant 0 : index
    %c129_128 = arith.constant 129 : index
    %138 = vector.load %arg12[%c0_127, %c129_128] : memref<16x640xf32, #tpu.memory_space<vmem>>, vector<16x384xf32>
    %c80 = arith.constant 80 : index
    %c0_129 = arith.constant 0 : index
    %139 = vector.load %arg13[%c80, %c0_129] : memref<144x384xf32, #tpu.memory_space<vmem>>, vector<16x384xf32>
    tpu.vector_store %arg13[%c80, %c0_129], %138 {strides = array<i32>} : memref<144x384xf32, #tpu.memory_space<vmem>>, vector<16x384xf32>,
    %c0_130 = arith.constant 0 : index
    %c145_131 = arith.constant 145 : index
    %140 = vector.load %arg12[%c0_130, %c145_131] : memref<16x640xf32, #tpu.memory_space<vmem>>, vector<16x384xf32>
    %c96 = arith.constant 96 : index
    %c0_132 = arith.constant 0 : index
    %141 = vector.load %arg13[%c96, %c0_132] : memref<144x384xf32, #tpu.memory_space<vmem>>, vector<16x384xf32>
    tpu.vector_store %arg13[%c96, %c0_132], %140 {strides = array<i32>} : memref<144x384xf32, #tpu.memory_space<vmem>>, vector<16x384xf32>,
    %c0_133 = arith.constant 0 : index
    %c146_134 = arith.constant 146 : index
    %142 = vector.load %arg12[%c0_133, %c146_134] : memref<16x640xf32, #tpu.memory_space<vmem>>, vector<16x384xf32>
    %c112 = arith.constant 112 : index
    %c0_135 = arith.constant 0 : index
    %143 = vector.load %arg13[%c112, %c0_135] : memref<144x384xf32, #tpu.memory_space<vmem>>, vector<16x384xf32>
    tpu.vector_store %arg13[%c112, %c0_135], %142 {strides = array<i32>} : memref<144x384xf32, #tpu.memory_space<vmem>>, vector<16x384xf32>,
    %c0_136 = arith.constant 0 : index
    %c147_137 = arith.constant 147 : index
    %144 = vector.load %arg12[%c0_136, %c147_137] : memref<16x640xf32, #tpu.memory_space<vmem>>, vector<16x384xf32>
    %c128_138 = arith.constant 128 : index
    %c0_139 = arith.constant 0 : index
    %145 = vector.load %arg13[%c128_138, %c0_139] : memref<144x384xf32, #tpu.memory_space<vmem>>, vector<16x384xf32>
    tpu.vector_store %arg13[%c128_138, %c0_139], %144 {strides = array<i32>} : memref<144x384xf32, #tpu.memory_space<vmem>>, vector<16x384xf32>,
    %c0_140 = arith.constant 0 : index
    %c0_141 = arith.constant 0 : index
    %146 = vector.load %arg6[%c0_140, %c0_141] : memref<16x144xbf16, #tpu.memory_space<vmem>>, vector<16x144xbf16>
    %c0_142 = arith.constant 0 : index
    %c0_143 = arith.constant 0 : index
    %147 = vector.load %arg13[%c0_142, %c0_143] : memref<144x384xf32, #tpu.memory_space<vmem>>, vector<144x384xf32>
    %148 = arith.truncf %147 : vector<144x384xf32> to vector<144x384xbf16>
    %cst_144 = arith.constant dense<0.000000e+00> : vector<16x384xf32>
    %149 = tpu.matmul %146, %148, %cst_144 {dimension_numbers = #tpu.dot_dimension_numbers<[1], [0], [0], [1], [0, 0, 1, 1], [], []>} : vector<16x144xbf16>, vector<144x384xbf16>, vector<16x384xf32> -> vector<16x384xf32>
    %c0_145 = arith.constant 0 : index
    %c0_146 = arith.constant 0 : index
    %150 = vector.load %arg7[%c0_145, %c0_146] : memref<16x1xf32, #tpu.memory_space<vmem>>, vector<16x1xf32>
    %151 = vector.broadcast %150 : vector<16x1xf32> to vector<16x384xf32>
    %152 = arith.addf %149, %151 : vector<16x384xf32>
    %cst_147 = arith.constant 0.000000e+00 : f32
    %153 = vector.broadcast %cst_147 : f32 to vector<16x384xf32>
    %154 = arith.maximumf %152, %153 : vector<16x384xf32>
    %155 = vector.extract_strided_slice %154 {offsets = [0, 0], sizes = [8, 384], strides = [1, 1]} : vector<16x384xf32> to vector<8x384xf32>
    %c0_148 = arith.constant 0 : index
    %c8_149 = arith.constant 8 : index
    %c0_150 = arith.constant 0 : index
    %156 = vector.load %arg10[%c0_148, %c8_149, %c0_150] : memref<1x32x384xf32, #tpu.memory_space<vmem>>, vector<1x8x384xf32>
    %157 = vector.shape_cast %156 : vector<1x8x384xf32> to vector<8x384xf32>
    %158 = vector.shape_cast %155 : vector<8x384xf32> to vector<1x8x384xf32>
    tpu.vector_store %arg10[%c0_148, %c8_149, %c0_150], %158 {strides = array<i32>} : memref<1x32x384xf32, #tpu.memory_space<vmem>>, vector<1x8x384xf32>,
    %159 = vector.extract_strided_slice %154 {offsets = [8, 0], sizes = [8, 384], strides = [1, 1]} : vector<16x384xf32> to vector<8x384xf32>
    %cst_151 = arith.constant 0.000000e+00 : f32
    %160 = vector.shape_cast %68 : vector<1x384xi1> to vector<1x384xi1>
    %161 = vector.broadcast %160 : vector<1x384xi1> to vector<8x384xi1>
    %162 = vector.broadcast %cst_151 : f32 to vector<8x384xf32>
    %163 = arith.select %161, %159, %162 : vector<8x384xi1>, vector<8x384xf32>
    %c0_152 = arith.constant 0 : index
    %c128_153 = arith.constant 128 : index
    %164 = vector.load %arg12[%c0_152, %c128_153] : memref<16x640xf32, #tpu.memory_space<vmem>>, vector<8x384xf32>
    tpu.vector_store %arg12[%c0_152, %c128_153], %163 {strides = array<i32>} : memref<16x640xf32, #tpu.memory_space<vmem>>, vector<8x384xf32>,
    %c0_154 = arith.constant 0 : index
    %c109_155 = arith.constant 109 : index
    %165 = vector.load %arg12[%c0_154, %c109_155] : memref<16x640xf32, #tpu.memory_space<vmem>>, vector<8x384xf32>
    %c0_156 = arith.constant 0 : index
    %c0_157 = arith.constant 0 : index
    %166 = vector.load %arg13[%c0_156, %c0_157] : memref<144x384xf32, #tpu.memory_space<vmem>>, vector<8x384xf32>
    tpu.vector_store %arg13[%c0_156, %c0_157], %165 {strides = array<i32>} : memref<144x384xf32, #tpu.memory_space<vmem>>, vector<8x384xf32>,
    %c0_158 = arith.constant 0 : index
    %c110_159 = arith.constant 110 : index
    %167 = vector.load %arg12[%c0_158, %c110_159] : memref<16x640xf32, #tpu.memory_space<vmem>>, vector<8x384xf32>
    %c8_160 = arith.constant 8 : index
    %c0_161 = arith.constant 0 : index
    %168 = vector.load %arg13[%c8_160, %c0_161] : memref<144x384xf32, #tpu.memory_space<vmem>>, vector<8x384xf32>
    tpu.vector_store %arg13[%c8_160, %c0_161], %167 {strides = array<i32>} : memref<144x384xf32, #tpu.memory_space<vmem>>, vector<8x384xf32>,
    %c0_162 = arith.constant 0 : index
    %c111_163 = arith.constant 111 : index
    %169 = vector.load %arg12[%c0_162, %c111_163] : memref<16x640xf32, #tpu.memory_space<vmem>>, vector<8x384xf32>
    %c16_164 = arith.constant 16 : index
    %c0_165 = arith.constant 0 : index
    %170 = vector.load %arg13[%c16_164, %c0_165] : memref<144x384xf32, #tpu.memory_space<vmem>>, vector<8x384xf32>
    tpu.vector_store %arg13[%c16_164, %c0_165], %169 {strides = array<i32>} : memref<144x384xf32, #tpu.memory_space<vmem>>, vector<8x384xf32>,
    %c0_166 = arith.constant 0 : index
    %c127_167 = arith.constant 127 : index
    %171 = vector.load %arg12[%c0_166, %c127_167] : memref<16x640xf32, #tpu.memory_space<vmem>>, vector<8x384xf32>
    %c24_168 = arith.constant 24 : index
    %c0_169 = arith.constant 0 : index
    %172 = vector.load %arg13[%c24_168, %c0_169] : memref<144x384xf32, #tpu.memory_space<vmem>>, vector<8x384xf32>
    tpu.vector_store %arg13[%c24_168, %c0_169], %171 {strides = array<i32>} : memref<144x384xf32, #tpu.memory_space<vmem>>, vector<8x384xf32>,
    %c0_170 = arith.constant 0 : index
    %c128_171 = arith.constant 128 : index
    %173 = vector.load %arg12[%c0_170, %c128_171] : memref<16x640xf32, #tpu.memory_space<vmem>>, vector<8x384xf32>
    %c32_172 = arith.constant 32 : index
    %c0_173 = arith.constant 0 : index
    %174 = vector.load %arg13[%c32_172, %c0_173] : memref<144x384xf32, #tpu.memory_space<vmem>>, vector<8x384xf32>
    tpu.vector_store %arg13[%c32_172, %c0_173], %173 {strides = array<i32>} : memref<144x384xf32, #tpu.memory_space<vmem>>, vector<8x384xf32>,
    %c0_174 = arith.constant 0 : index
    %c129_175 = arith.constant 129 : index
    %175 = vector.load %arg12[%c0_174, %c129_175] : memref<16x640xf32, #tpu.memory_space<vmem>>, vector<8x384xf32>
    %c40 = arith.constant 40 : index
    %c0_176 = arith.constant 0 : index
    %176 = vector.load %arg13[%c40, %c0_176] : memref<144x384xf32, #tpu.memory_space<vmem>>, vector<8x384xf32>
    tpu.vector_store %arg13[%c40, %c0_176], %175 {strides = array<i32>} : memref<144x384xf32, #tpu.memory_space<vmem>>, vector<8x384xf32>,
    %c0_177 = arith.constant 0 : index
    %c145_178 = arith.constant 145 : index
    %177 = vector.load %arg12[%c0_177, %c145_178] : memref<16x640xf32, #tpu.memory_space<vmem>>, vector<8x384xf32>
    %c48_179 = arith.constant 48 : index
    %c0_180 = arith.constant 0 : index
    %178 = vector.load %arg13[%c48_179, %c0_180] : memref<144x384xf32, #tpu.memory_space<vmem>>, vector<8x384xf32>
    tpu.vector_store %arg13[%c48_179, %c0_180], %177 {strides = array<i32>} : memref<144x384xf32, #tpu.memory_space<vmem>>, vector<8x384xf32>,
    %c0_181 = arith.constant 0 : index
    %c146_182 = arith.constant 146 : index
    %179 = vector.load %arg12[%c0_181, %c146_182] : memref<16x640xf32, #tpu.memory_space<vmem>>, vector<8x384xf32>
    %c56 = arith.constant 56 : index
    %c0_183 = arith.constant 0 : index
    %180 = vector.load %arg13[%c56, %c0_183] : memref<144x384xf32, #tpu.memory_space<vmem>>, vector<8x384xf32>
    tpu.vector_store %arg13[%c56, %c0_183], %179 {strides = array<i32>} : memref<144x384xf32, #tpu.memory_space<vmem>>, vector<8x384xf32>,
    %c0_184 = arith.constant 0 : index
    %c147_185 = arith.constant 147 : index
    %181 = vector.load %arg12[%c0_184, %c147_185] : memref<16x640xf32, #tpu.memory_space<vmem>>, vector<8x384xf32>
    %c64_186 = arith.constant 64 : index
    %c0_187 = arith.constant 0 : index
    %182 = vector.load %arg13[%c64_186, %c0_187] : memref<144x384xf32, #tpu.memory_space<vmem>>, vector<8x384xf32>
    tpu.vector_store %arg13[%c64_186, %c0_187], %181 {strides = array<i32>} : memref<144x384xf32, #tpu.memory_space<vmem>>, vector<8x384xf32>,
    %c0_188 = arith.constant 0 : index
    %c0_189 = arith.constant 0 : index
    %183 = vector.load %arg8[%c0_188, %c0_189] : memref<8x72xbf16, #tpu.memory_space<vmem>>, vector<8x72xbf16>
    %c0_190 = arith.constant 0 : index
    %c0_191 = arith.constant 0 : index
    %184 = vector.load %arg13[%c0_190, %c0_191] : memref<144x384xf32, #tpu.memory_space<vmem>>, vector<72x384xf32>
    %185 = arith.truncf %184 : vector<72x384xf32> to vector<72x384xbf16>
    %cst_192 = arith.constant dense<0.000000e+00> : vector<8x384xf32>
    %186 = tpu.matmul %183, %185, %cst_192 {dimension_numbers = #tpu.dot_dimension_numbers<[1], [0], [0], [1], [0, 0, 1, 1], [], []>} : vector<8x72xbf16>, vector<72x384xbf16>, vector<8x384xf32> -> vector<8x384xf32>
    %c0_193 = arith.constant 0 : index
    %c0_194 = arith.constant 0 : index
    %187 = vector.load %arg9[%c0_193, %c0_194] : memref<8x1xf32, #tpu.memory_space<vmem>>, vector<8x1xf32>
    %188 = vector.broadcast %187 : vector<8x1xf32> to vector<8x384xf32>
    %189 = arith.addf %186, %188 : vector<8x384xf32>
    %cst_195 = arith.constant 0.000000e+00 : f32
    %190 = vector.broadcast %cst_195 : f32 to vector<8x384xf32>
    %191 = arith.maximumf %189, %190 : vector<8x384xf32>
    %c0_196 = arith.constant 0 : index
    %c16_197 = arith.constant 16 : index
    %c0_198 = arith.constant 0 : index
    %192 = vector.load %arg10[%c0_196, %c16_197, %c0_198] : memref<1x32x384xf32, #tpu.memory_space<vmem>>, vector<1x8x384xf32>
    %193 = vector.shape_cast %192 : vector<1x8x384xf32> to vector<8x384xf32>
    %194 = vector.shape_cast %191 : vector<8x384xf32> to vector<1x8x384xf32>
    tpu.vector_store %arg10[%c0_196, %c16_197, %c0_198], %194 {strides = array<i32>} : memref<1x32x384xf32, #tpu.memory_space<vmem>>, vector<1x8x384xf32>,
    return
  }
  func.func @transform_0(%arg0: i32) -> (i32, i32, i32, i32) {
    %c0_i32 = arith.constant 0 : i32
    %c0_i32_0 = arith.constant 0 : i32
    %c0_i32_1 = arith.constant 0 : i32
    %c0_i32_2 = arith.constant 0 : i32
    return %arg0, %c0_i32, %c0_i32_0, %c0_i32_1 : i32, i32, i32, i32
  }
  func.func @transform_1(%arg0: i32) -> (i32, i32) {
    %c0_i32 = arith.constant 0 : i32
    %c0_i32_0 = arith.constant 0 : i32
    %c0_i32_1 = arith.constant 0 : i32
    return %c0_i32, %c0_i32_0 : i32, i32
  }
  func.func @transform_2(%arg0: i32) -> (i32, i32) {
    %c0_i32 = arith.constant 0 : i32
    %c0_i32_0 = arith.constant 0 : i32
    %c0_i32_1 = arith.constant 0 : i32
    return %c0_i32, %c0_i32_0 : i32, i32
  }
  func.func @transform_3(%arg0: i32) -> (i32, i32) {
    %c0_i32 = arith.constant 0 : i32
    %c0_i32_0 = arith.constant 0 : i32
    %c0_i32_1 = arith.constant 0 : i32
    return %c0_i32, %c0_i32_0 : i32, i32
  }
  func.func @transform_4(%arg0: i32) -> (i32, i32) {
    %c0_i32 = arith.constant 0 : i32
    %c0_i32_0 = arith.constant 0 : i32
    %c0_i32_1 = arith.constant 0 : i32
    return %c0_i32, %c0_i32_0 : i32, i32
  }
  func.func @transform_5(%arg0: i32) -> (i32, i32) {
    %c0_i32 = arith.constant 0 : i32
    %c0_i32_0 = arith.constant 0 : i32
    %c0_i32_1 = arith.constant 0 : i32
    return %c0_i32, %c0_i32_0 : i32, i32
  }
  func.func @transform_6(%arg0: i32) -> (i32, i32) {
    %c0_i32 = arith.constant 0 : i32
    %c0_i32_0 = arith.constant 0 : i32
    %c0_i32_1 = arith.constant 0 : i32
    return %c0_i32, %c0_i32_0 : i32, i32
  }
  func.func @transform_7(%arg0: i32) -> (i32, i32) {
    %c0_i32 = arith.constant 0 : i32
    %c0_i32_0 = arith.constant 0 : i32
    %c0_i32_1 = arith.constant 0 : i32
    return %c0_i32, %c0_i32_0 : i32, i32
  }
  func.func @transform_8(%arg0: i32) -> (i32, i32) {
    %c0_i32 = arith.constant 0 : i32
    %c0_i32_0 = arith.constant 0 : i32
    %c0_i32_1 = arith.constant 0 : i32
    return %c0_i32, %c0_i32_0 : i32, i32
  }
  func.func @transform_9(%arg0: i32) -> (i32, i32, i32) {
    %c0_i32 = arith.constant 0 : i32
    %c0_i32_0 = arith.constant 0 : i32
    %c0_i32_1 = arith.constant 0 : i32
    return %arg0, %c0_i32, %c0_i32_0 : i32, i32, i32
  }
}

</mosaic_0001>

<llo_original>
// kernel: _inception_forward.1
$region0: #{_inception_forward.1}
  #allocation0 [shape = 'u32[]', space=smem, size = 0x4, offset = 0x4, fixed_abs, tag = 'smem constant byte address 0x4 - core index']
  #allocation1 [shape = 'u32[72,128]{1,0:T(1,128)}', space=vmem, size = 0x9000, scoped, tag = 'internal scratch']
  #allocation2 [shape = 'f32[4,640]{1,0:T(4,128)}', space=vmem, size = 0x2800, scoped, tag = 'scratch operand']
  #allocation3 [shape = 'f32[16,640]{1,0:T(8,128)}', space=vmem, size = 0xa000, scoped, tag = 'scratch operand']
  #allocation4 [shape = 'f32[144,384]{1,0:T(8,128)}', space=vmem, size = 0x36000, scoped, tag = 'scratch operand']
  %s0 = inlined_call_operand.vmem [shape: f32[2,4,16,16], index: 0, kind: input, shape index: {}]
  %s1 = inlined_call_operand.vmem [shape: bf16[24,4], index: 1, kind: input, shape index: {}]
  %s2 = inlined_call_operand.vmem [shape: f32[24,1], index: 2, kind: input, shape index: {}]
  %s3 = inlined_call_operand.vmem [shape: bf16[8,4], index: 3, kind: input, shape index: {}]
  %s4 = inlined_call_operand.vmem [shape: f32[8,1], index: 4, kind: input, shape index: {}]
  %s5 = inlined_call_operand.vmem [shape: bf16[16,144], index: 5, kind: input, shape index: {}]
  %s6 = inlined_call_operand.vmem [shape: f32[16,1], index: 6, kind: input, shape index: {}]
  %s7 = inlined_call_operand.vmem [shape: bf16[8,72], index: 7, kind: input, shape index: {}]
  %s8 = inlined_call_operand.vmem [shape: f32[8,1], index: 8, kind: input, shape index: {}]
  %s9 = inlined_call_operand.vmem [shape: f32[2,32,384], index: 9, kind: output, shape index: {}]
  %s10 = sld [smem:[#allocation0]]
  $region69: #{_inception_forward.1} parent=0
    _
  %s12 = ssub.s32 1, %s10
  %s13 = scalar_select 0, %s12, %s10
  loop: start=0, step=1, limit=4
  $region2: #{_inception_forward.1} parent=0 // loop_pre_header
    _
  $region3: #{_inception_forward.1} parent=0 // loop_header
    %s15 = sphi 0, %s19
    %p16 = scmp.ge.s32.totalorder %s15, 4
    %s25 = sphi 0, %s27
    %s28 = sphi 0, %s25
    %s29 = sphi 0, %s28
    %s45 = sphi 0, %s29
    %s49 = sphi 0, %s49
    %s51 = sphi 0, %s49
    %s52 = sphi 0, %s51
    %s66 = sphi 0, %s52
    %s70 = sphi 0, %s70
    %s72 = sphi 0, %s70
    %s73 = sphi 0, %s72
    %s87 = sphi 0, %s73
    %s91 = sphi 0, %s91
    %s93 = sphi 0, %s91
    %s94 = sphi 0, %s93
    %s108 = sphi 0, %s94
    %s112 = sphi 0, %s112
    %s114 = sphi 0, %s112
    %s115 = sphi 0, %s114
    %s129 = sphi 0, %s115
    %s133 = sphi 0, %s133
    %s135 = sphi 0, %s133
    %s136 = sphi 0, %s135
    %s150 = sphi 0, %s136
    %s154 = sphi 0, %s154
    %s156 = sphi 0, %s154
    %s157 = sphi 0, %s156
    %s171 = sphi 0, %s157
    %s175 = sphi 0, %s175
    %s177 = sphi 0, %s175
    %s178 = sphi 0, %s177
    %s192 = sphi 0, %s178
    %s196 = sphi 0, %s196
    %s198 = sphi 0, %s196
    %s199 = sphi 0, %s198
    %s213 = sphi 0, %s199
    %s219 = sphi 0, %s221
    %s222 = sphi 0, %s219
    %s223 = sphi 0, %s222
    %s239 = sphi 0, %s223
  $region4: #{_inception_forward.1} parent=0 // loop_header_branch
    %18 = sbr.rel (%p16) target = $region8
  $region5: #{_inception_forward.1} parent=0 // loop_body
    %s20 = ssub.s32 %s15, 1
    %s21 = ssub.s32 %s15, 2
    %s22 = sadd.s32 %s15, 1
    %s23 = ssub.s32 %s15, %s22
    %p24 = scmp.eq.s32.totalorder %s23, 0
    %s26 = sadd.s32 %s25, 1
    %s27 = scalar_select %p24, %s25, %s26
    %p30 = pneg %p24
    %p31 = scmp.eq.s32.totalorder %s15, 1
    %p32 = por %p30, %p31
    %p33 = scmp.ne.s32.totalorder %s25, %s28
    %p34 = scmp.eq.s32.totalorder %s15, 0
    %p35 = por %p33, %p34
    %p36 = scmp.ne.s32.totalorder %s25, %s28
    %p37 = scmp.eq.s32.totalorder %s20, 1
    %p38 = por %p36, %p37
    %p39 = scmp.ne.s32.totalorder %s28, %s29
    %p40 = scmp.eq.s32.totalorder %s20, 0
    %p41 = por %p39, %p40
    %p42 = scmp.ne.s32.totalorder %s28, %s29
    %p43 = scmp.eq.s32.totalorder %s21, 1
    %p44 = por %p42, %p43
    %p46 = scmp.ne.s32.totalorder %s29, %s45
    %p47 = scmp.eq.s32.totalorder %s21, 0
    %p48 = por %p46, %p47
    %s50 = sadd.s32 %s49, 1
    %p53 = scmp.eq.s32.totalorder %s15, 1
    %p54 = scmp.ne.s32.totalorder %s49, %s51
    %p55 = scmp.eq.s32.totalorder %s15, 0
    %p56 = por %p54, %p55
    %p57 = scmp.ne.s32.totalorder %s49, %s51
    %p58 = scmp.eq.s32.totalorder %s20, 1
    %p59 = por %p57, %p58
    %p60 = scmp.ne.s32.totalorder %s51, %s52
    %p61 = scmp.eq.s32.totalorder %s20, 0
    %p62 = por %p60, %p61
    %p63 = scmp.ne.s32.totalorder %s51, %s52
    %p64 = scmp.eq.s32.totalorder %s21, 1
    %p65 = por %p63, %p64
    %p67 = scmp.ne.s32.totalorder %s52, %s66
    %p68 = scmp.eq.s32.totalorder %s21, 0
    %p69 = por %p67, %p68
    %s71 = sadd.s32 %s70, 1
    %p74 = scmp.eq.s32.totalorder %s15, 1
    %p75 = scmp.ne.s32.totalorder %s70, %s72
    %p76 = scmp.eq.s32.totalorder %s15, 0
    %p77 = por %p75, %p76
    %p78 = scmp.ne.s32.totalorder %s70, %s72
    %p79 = scmp.eq.s32.totalorder %s20, 1
    %p80 = por %p78, %p79
    %p81 = scmp.ne.s32.totalorder %s72, %s73
    %p82 = scmp.eq.s32.totalorder %s20, 0
    %p83 = por %p81, %p82
    %p84 = scmp.ne.s32.totalorder %s72, %s73
    %p85 = scmp.eq.s32.totalorder %s21, 1
    %p86 = por %p84, %p85
    %p88 = scmp.ne.s32.totalorder %s73, %s87
    %p89 = scmp.eq.s32.totalorder %s21, 0
    %p90 = por %p88, %p89
    %s92 = sadd.s32 %s91, 1
    %p95 = scmp.eq.s32.totalorder %s15, 1
    %p96 = scmp.ne.s32.totalorder %s91, %s93
    %p97 = scmp.eq.s32.totalorder %s15, 0
    %p98 = por %p96, %p97
    %p99 = scmp.ne.s32.totalorder %s91, %s93
    %p100 = scmp.eq.s32.totalorder %s20, 1
    %p101 = por %p99, %p100
    %p102 = scmp.ne.s32.totalorder %s93, %s94
    %p103 = scmp.eq.s32.totalorder %s20, 0
    %p104 = por %p102, %p103
    %p105 = scmp.ne.s32.totalorder %s93, %s94
    %p106 = scmp.eq.s32.totalorder %s21, 1
    %p107 = por %p105, %p106
    %p109 = scmp.ne.s32.totalorder %s94, %s108
    %p110 = scmp.eq.s32.totalorder %s21, 0
    %p111 = por %p109, %p110
    %s113 = sadd.s32 %s112, 1
    %p116 = scmp.eq.s32.totalorder %s15, 1
    %p117 = scmp.ne.s32.totalorder %s112, %s114
    %p118 = scmp.eq.s32.totalorder %s15, 0
    %p119 = por %p117, %p118
    %p120 = scmp.ne.s32.totalorder %s112, %s114
    %p121 = scmp.eq.s32.totalorder %s20, 1
    %p122 = por %p120, %p121
    %p123 = scmp.ne.s32.totalorder %s114, %s115
    %p124 = scmp.eq.s32.totalorder %s20, 0
    %p125 = por %p123, %p124
    %p126 = scmp.ne.s32.totalorder %s114, %s115
    %p127 = scmp.eq.s32.totalorder %s21, 1
    %p128 = por %p126, %p127
    %p130 = scmp.ne.s32.totalorder %s115, %s129
    %p131 = scmp.eq.s32.totalorder %s21, 0
    %p132 = por %p130, %p131
    %s134 = sadd.s32 %s133, 1
    %p137 = scmp.eq.s32.totalorder %s15, 1
    %p138 = scmp.ne.s32.totalorder %s133, %s135
    %p139 = scmp.eq.s32.totalorder %s15, 0
    %p140 = por %p138, %p139
    %p141 = scmp.ne.s32.totalorder %s133, %s135
    %p142 = scmp.eq.s32.totalorder %s20, 1
    %p143 = por %p141, %p142
    %p144 = scmp.ne.s32.totalorder %s135, %s136
    %p145 = scmp.eq.s32.totalorder %s20, 0
    %p146 = por %p144, %p145
    %p147 = scmp.ne.s32.totalorder %s135, %s136
    %p148 = scmp.eq.s32.totalorder %s21, 1
    %p149 = por %p147, %p148
    %p151 = scmp.ne.s32.totalorder %s136, %s150
    %p152 = scmp.eq.s32.totalorder %s21, 0
    %p153 = por %p151, %p152
    %s155 = sadd.s32 %s154, 1
    %p158 = scmp.eq.s32.totalorder %s15, 1
    %p159 = scmp.ne.s32.totalorder %s154, %s156
    %p160 = scmp.eq.s32.totalorder %s15, 0
    %p161 = por %p159, %p160
    %p162 = scmp.ne.s32.totalorder %s154, %s156
    %p163 = scmp.eq.s32.totalorder %s20, 1
    %p164 = por %p162, %p163
    %p165 = scmp.ne.s32.totalorder %s156, %s157
    %p166 = scmp.eq.s32.totalorder %s20, 0
    %p167 = por %p165, %p166
    %p168 = scmp.ne.s32.totalorder %s156, %s157
    %p169 = scmp.eq.s32.totalorder %s21, 1
    %p170 = por %p168, %p169
    %p172 = scmp.ne.s32.totalorder %s157, %s171
    %p173 = scmp.eq.s32.totalorder %s21, 0
    %p174 = por %p172, %p173
    %s176 = sadd.s32 %s175, 1
    %p179 = scmp.eq.s32.totalorder %s15, 1
    %p180 = scmp.ne.s32.totalorder %s175, %s177
    %p181 = scmp.eq.s32.totalorder %s15, 0
    %p182 = por %p180, %p181
    %p183 = scmp.ne.s32.totalorder %s175, %s177
    %p184 = scmp.eq.s32.totalorder %s20, 1
    %p185 = por %p183, %p184
    %p186 = scmp.ne.s32.totalorder %s177, %s178
    %p187 = scmp.eq.s32.totalorder %s20, 0
    %p188 = por %p186, %p187
    %p189 = scmp.ne.s32.totalorder %s177, %s178
    %p190 = scmp.eq.s32.totalorder %s21, 1
    %p191 = por %p189, %p190
    %p193 = scmp.ne.s32.totalorder %s178, %s192
    %p194 = scmp.eq.s32.totalorder %s21, 0
    %p195 = por %p193, %p194
    %s197 = sadd.s32 %s196, 1
    %p200 = scmp.eq.s32.totalorder %s15, 1
    %p201 = scmp.ne.s32.totalorder %s196, %s198
    %p202 = scmp.eq.s32.totalorder %s15, 0
    %p203 = por %p201, %p202
    %p204 = scmp.ne.s32.totalorder %s196, %s198
    %p205 = scmp.eq.s32.totalorder %s20, 1
    %p206 = por %p204, %p205
    %p207 = scmp.ne.s32.totalorder %s198, %s199
    %p208 = scmp.eq.s32.totalorder %s20, 0
    %p209 = por %p207, %p208
    %p210 = scmp.ne.s32.totalorder %s198, %s199
    %p211 = scmp.eq.s32.totalorder %s21, 1
    %p212 = por %p210, %p211
    %p214 = scmp.ne.s32.totalorder %s199, %s213
    %p215 = scmp.eq.s32.totalorder %s21, 0
    %p216 = por %p214, %p215
    %s217 = ssub.s32 %s15, %s22
    %p218 = scmp.eq.s32.totalorder %s217, 0
    %s220 = sadd.s32 %s219, 1
    %s221 = scalar_select %p218, %s219, %s220
    %p224 = pneg %p218
    %p225 = scmp.eq.s32.totalorder %s15, 1
    %p226 = por %p224, %p225
    %p227 = scmp.ne.s32.totalorder %s219, %s222
    %p228 = scmp.eq.s32.totalorder %s15, 0
    %p229 = por %p227, %p228
    %p230 = scmp.ne.s32.totalorder %s219, %s222
    %p231 = scmp.eq.s32.totalorder %s20, 1
    %p232 = por %p230, %p231
    %p233 = scmp.ne.s32.totalorder %s222, %s223
    %p234 = scmp.eq.s32.totalorder %s20, 0
    %p235 = por %p233, %p234
    %p236 = scmp.ne.s32.totalorder %s222, %s223
    %p237 = scmp.eq.s32.totalorder %s21, 1
    %p238 = por %p236, %p237
    %p240 = scmp.ne.s32.totalorder %s223, %s239
    %p241 = scmp.eq.s32.totalorder %s21, 0
    %p242 = por %p240, %p241
    %p243 = scmp.le.s32.totalorder 1, %s15
    %p244 = scmp.lt.s32.totalorder %s15, 3
    %p245 = pnand %p243, %p244
    %p246 = pneg %p245
    // Predicated region
    $region9: #{_inception_forward.1} parent=5 // pred_check
      _
    $region10: #{_inception_forward.1} parent=5 // pred_check_branch
      %248 = sbr.rel (%p245) target = $region12
    $region11: #{_inception_forward.1} parent=5 // pred_region
      %s249 = ssub.s32 %s15, 1
      // Predicated region
      $region13: #{_inception_forward.1} parent=11 // pred_check
        %p250 = pneg %p62
      $region14: #{_inception_forward.1} parent=11 // pred_check_branch
        %252 = sbr.rel (%p250) target = $region16
      $region15: #{_inception_forward.1} parent=11 // pred_region
        _
      $region16: #{_inception_forward.1} parent=11 // pred_fallthru
        _
      // Predicated region
      $region17: #{_inception_forward.1} parent=11 // pred_check
        %p253 = pneg %p83
      $region18: #{_inception_forward.1} parent=11 // pred_check_branch
        %255 = sbr.rel (%p253) target = $region20
      $region19: #{_inception_forward.1} parent=11 // pred_region
        _
      $region20: #{_inception_forward.1} parent=11 // pred_fallthru
        _
      // Predicated region
      $region21: #{_inception_forward.1} parent=11 // pred_check
        %p256 = pneg %p104
      $region22: #{_inception_forward.1} parent=11 // pred_check_branch
        %258 = sbr.rel (%p256) target = $region24
      $region23: #{_inception_forward.1} parent=11 // pred_region
        _
      $region24: #{_inception_forward.1} parent=11 // pred_fallthru
        _
      // Predicated region
      $region25: #{_inception_forward.1} parent=11 // pred_check
        %p259 = pneg %p125
      $region26: #{_inception_forward.1} parent=11 // pred_check_branch
        %261 = sbr.rel (%p259) target = $region28
      $region27: #{_inception_forward.1} parent=11 // pred_region
        _
      $region28: #{_inception_forward.1} parent=11 // pred_fallthru
        _
      // Predicated region
      $region29: #{_inception_forward.1} parent=11 // pred_check
        %p262 = pneg %p146
      $region30: #{_inception_forward.1} parent=11 // pred_check_branch
        %264 = sbr.rel (%p262) target = $region32
      $region31: #{_inception_forward.1} parent=11 // pred_region
        _
      $region32: #{_inception_forward.1} parent=11 // pred_fallthru
        _
      // Predicated region
      $region33: #{_inception_forward.1} parent=11 // pred_check
        %p265 = pneg %p167
      $region34: #{_inception_forward.1} parent=11 // pred_check_branch
        %267 = sbr.rel (%p265) target = $region36
      $region35: #{_inception_forward.1} parent=11 // pred_region
        _
      $region36: #{_inception_forward.1} parent=11 // pred_fallthru
        _
      // Predicated region
      $region37: #{_inception_forward.1} parent=11 // pred_check
        %p268 = pneg %p188
      $region38: #{_inception_forward.1} parent=11 // pred_check_branch
        %270 = sbr.rel (%p268) target = $region40
      $region39: #{_inception_forward.1} parent=11 // pred_region
        _
      $region40: #{_inception_forward.1} parent=11 // pred_fallthru
        _
      // Predicated region
      $region41: #{_inception_forward.1} parent=11 // pred_check
        %p271 = pneg %p209
      $region42: #{_inception_forward.1} parent=11 // pred_check_branch
        %273 = sbr.rel (%p271) target = $region44
      $region43: #{_inception_forward.1} parent=11 // pred_region
        _
      $region44: #{_inception_forward.1} parent=11 // pred_fallthru
        _
    $region12: #{_inception_forward.1} parent=5 // pred_fallthru
      _
    %p274 = scmp.lt.s32.totalorder %s15, 2
    // Predicated region
    $region45: #{_inception_forward.1} parent=5 // pred_check
      %p275 = pneg %p274
    $region46: #{_inception_forward.1} parent=5 // pred_check_branch
      %277 = sbr.rel (%p275) target = $region48
    $region47: #{_inception_forward.1} parent=5 // pred_region
      // Predicated region
      $region49: #{_inception_forward.1} parent=47 // pred_check
        %p278 = pneg %p35
      $region50: #{_inception_forward.1} parent=47 // pred_check_branch
        %280 = sbr.rel (%p278) target = $region52
      $region51: #{_inception_forward.1} parent=47 // pred_region
        %p281 = scmp.lt.s32.totalorder %s15, 1
        %s282 = scalar_select %p281, %s15, 1
        %s283 = smul.addr %s282, 8
        %s284 = smul.addr %s283, 8
        %s285 = scalar_lea.vmem %s0, %s284
      $region52: #{_inception_forward.1} parent=47 // pred_fallthru
        _
    $region48: #{_inception_forward.1} parent=5 // pred_fallthru
      _
    %p286 = scmp.le.s32.totalorder 1, %s15
    %p287 = scmp.lt.s32.totalorder %s15, 3
    %p288 = pnand %p286, %p287
    %p289 = pneg %p288
    // Predicated region
    $region53: #{_inception_forward.1} parent=5 // pred_check
      _
    $region54: #{_inception_forward.1} parent=5 // pred_check_branch
      %291 = sbr.rel (%p288) target = $region56
    $region55: #{_inception_forward.1} parent=5 // pred_region
      %s292 = ssub.s32 %s15, 1
      %p293 = scmp.lt.s32.totalorder %s20, 1
      %s294 = scalar_select %p293, %s20, 1
      %s295 = smul.addr %s294, 8
      %s296 = smul.addr %s295, 8
      %s297 = scalar_lea.vmem %s0, %s296
      %p298 = pneg %p41
      %p299 = pneg %p38
      %p300 = pneg %p62
      %p301 = pneg %p59
      %p302 = pneg %p83
      %p303 = pneg %p80
      %p304 = pneg %p104
      %p305 = pneg %p101
      %p306 = pneg %p125
      %p307 = pneg %p122
      %p308 = pneg %p146
      %p309 = pneg %p143
      %p310 = pneg %p167
      %p311 = pneg %p164
      %p312 = pneg %p188
      %p313 = pneg %p185
      %p314 = pneg %p209
      %p315 = pneg %p206
      %p316 = pneg %p235
      %p317 = pneg %p232
      %p318 = scmp.lt.s32.totalorder %s20, 1
      %s319 = scalar_select %p318, %s20, 1
      %s320 = smul.addr %s319, 12
      %s321 = smul.addr %s320, 8
      %s322 = scalar_lea.vmem %s9, %s321
      %p323 = scmp.lt.s32.totalorder %s20, 1
      %s324 = scalar_select %p323, %s20, 1
      %s325 = smul.addr %s324, 8
      %s326 = smul.addr %s325, 8
      %s327 = scalar_lea.vmem %s0, %s326
      %p328 = scmp.lt.s32.totalorder %s20, 1
      %s329 = scalar_select %p328, %s20, 1
      %s330 = smul.addr %s329, 12
      %s331 = smul.addr %s330, 8
      %s332 = scalar_lea.vmem %s9, %s331
      %334 = vst [vmem:[#allocation2] sm:$0xff] -3e+38
      %335 = vst [vmem:[#allocation2 + $0x8] sm:$0xff] -3e+38
      %336 = vst [vmem:[#allocation2 + $0x10] sm:$0xf] -3e+38
      %v337 = vld [vmem:[%s327] sm:$0x1]
      %v338 = vld [vmem:[%s327 + $0x10] sm:$0x1]
      %v339 = vld [vmem:[%s327 + $0x20] sm:$0x1]
      %v340 = vld [vmem:[%s327 + $0x30] sm:$0x1]
      %v345 = vrot.slane %v338, 7
      %vm346 = vcmask 1041409
      %v347 = vsel %vm346, %v345, %v337
      %vm348 = vcmask 1045509
      %v349 = vsel %vm348, %v345, %v347
      %v350 = vrot.slane %v339, 6
      %vm351 = vcmask 1042434
      %v352 = vsel %vm351, %v350, %v349
      %vm353 = vcmask 1046534
      %v354 = vsel %vm353, %v350, %v352
      %v355 = vrot.slane %v340, 5
      %vm356 = vcmask 1043459
      %v357 = vsel %vm356, %v355, %v354
      %vm358 = vcmask 1047559
      %v359 = vsel %vm358, %v355, %v357
      %360 = vrot.lane.b32.xlu0 %v359, 19
      %v361 = vpop.permute.xlu0 %360
      %vm363 = vcmask 281752
      %364 = vst.msk [vmem:[#allocation2 + $0x4] sm:$0xf] %vm363, %v361
      %v365 = vld [vmem:[%s327 + $0x1] sm:$0x1]
      %v366 = vld [vmem:[%s327 + $0x11] sm:$0x1]
      %v367 = vld [vmem:[%s327 + $0x21] sm:$0x1]
      %v368 = vld [vmem:[%s327 + $0x31] sm:$0x1]
      %v373 = vrot.slane %v366, 7
      %v374 = vsel %vm346, %v373, %v365
      %v375 = vsel %vm348, %v373, %v374
      %v376 = vrot.slane %v367, 6
      %v377 = vsel %vm351, %v376, %v375
      %v378 = vsel %vm353, %v376, %v377
      %v379 = vrot.slane %v368, 5
      %v380 = vsel %vm356, %v379, %v378
      %v381 = vsel %vm358, %v379, %v380
      %382 = vrot.lane.b32.xlu0 %v381, 37
      %v383 = vpop.permute.xlu0 %382
      %vm385 = vcmask 429352
      %386 = vst.msk [vmem:[#allocation2 + $0x4] sm:$0xf] %vm385, %v383
      %v387 = vld [vmem:[%s327 + $0x2] sm:$0x1]
      %v388 = vld [vmem:[%s327 + $0x12] sm:$0x1]
      %v389 = vld [vmem:[%s327 + $0x22] sm:$0x1]
      %v390 = vld [vmem:[%s327 + $0x32] sm:$0x1]
      %v395 = vrot.slane %v388, 7
      %v396 = vsel %vm346, %v395, %v387
      %v397 = vsel %vm348, %v395, %v396
      %v398 = vrot.slane %v389, 6
      %v399 = vsel %vm351, %v398, %v397
      %v400 = vsel %vm353, %v398, %v399
      %v401 = vrot.slane %v390, 5
      %v402 = vsel %vm356, %v401, %v400
      %v403 = vsel %vm358, %v401, %v402
      %404 = vrot.lane.b32.xlu0 %v403, 55
      %v405 = vpop.permute.xlu0 %404
      %vm407 = vcmask 576952
      %408 = vst.msk [vmem:[#allocation2 + $0x4] sm:$0xf] %vm407, %v405
      %v409 = vld [vmem:[%s327 + $0x3] sm:$0x1]
      %v410 = vld [vmem:[%s327 + $0x13] sm:$0x1]
      %v411 = vld [vmem:[%s327 + $0x23] sm:$0x1]
      %v412 = vld [vmem:[%s327 + $0x33] sm:$0x1]
      %v417 = vrot.slane %v410, 7
      %v418 = vsel %vm346, %v417, %v409
      %v419 = vsel %vm348, %v417, %v418
      %v420 = vrot.slane %v411, 6
      %v421 = vsel %vm351, %v420, %v419
      %v422 = vsel %vm353, %v420, %v421
      %v423 = vrot.slane %v412, 5
      %v424 = vsel %vm356, %v423, %v422
      %v425 = vsel %vm358, %v423, %v424
      %426 = vrot.lane.b32.xlu0 %v425, 73
      %v427 = vpop.permute.xlu0 %426
      %vm429 = vcmask 724552
      %430 = vst.msk [vmem:[#allocation2 + $0x4] sm:$0xf] %vm429, %v427
      %v431 = vld [vmem:[%s327 + $0x4] sm:$0x1]
      %v432 = vld [vmem:[%s327 + $0x14] sm:$0x1]
      %v433 = vld [vmem:[%s327 + $0x24] sm:$0x1]
      %v434 = vld [vmem:[%s327 + $0x34] sm:$0x1]
      %v439 = vrot.slane %v432, 7
      %v440 = vsel %vm346, %v439, %v431
      %v441 = vsel %vm348, %v439, %v440
      %v442 = vrot.slane %v433, 6
      %v443 = vsel %vm351, %v442, %v441
      %v444 = vsel %vm353, %v442, %v443
      %v445 = vrot.slane %v434, 5
      %v446 = vsel %vm356, %v445, %v444
      %v447 = vsel %vm358, %v445, %v446
      %448 = vrot.lane.b32.xlu0 %v447, 91
      %v449 = vpop.permute.xlu0 %448
      %vm451 = vcmask 872152
      %452 = vst.msk [vmem:[#allocation2 + $0x4] sm:$0xf] %vm451, %v449
      %v453 = vld [vmem:[%s327 + $0x5] sm:$0x1]
      %v454 = vld [vmem:[%s327 + $0x15] sm:$0x1]
      %v455 = vld [vmem:[%s327 + $0x25] sm:$0x1]
      %v456 = vld [vmem:[%s327 + $0x35] sm:$0x1]
      %v461 = vrot.slane %v454, 7
      %v462 = vsel %vm346, %v461, %v453
      %v463 = vsel %vm348, %v461, %v462
      %v464 = vrot.slane %v455, 6
      %v465 = vsel %vm351, %v464, %v463
      %v466 = vsel %vm353, %v464, %v465
      %v467 = vrot.slane %v456, 5
      %v468 = vsel %vm356, %v467, %v466
      %v469 = vsel %vm358, %v467, %v468
      %470 = vrot.lane.b32.xlu0 %v469, 109
      %v471 = vpop.permute.xlu0 %470
      %vm473 = vcmask 1019752
      %474 = vst.msk [vmem:[#allocation2 + $0x4] sm:$0xf] %vm473, %v471
      %v475 = vld [vmem:[%s327 + $0x6] sm:$0x1]
      %v476 = vld [vmem:[%s327 + $0x16] sm:$0x1]
      %v477 = vld [vmem:[%s327 + $0x26] sm:$0x1]
      %v478 = vld [vmem:[%s327 + $0x36] sm:$0x1]
      %v483 = vrot.slane %v476, 7
      %v484 = vsel %vm346, %v483, %v475
      %v485 = vsel %vm348, %v483, %v484
      %v486 = vrot.slane %v477, 6
      %v487 = vsel %vm351, %v486, %v485
      %v488 = vsel %vm353, %v486, %v487
      %v489 = vrot.slane %v478, 5
      %v490 = vsel %vm356, %v489, %v488
      %v491 = vsel %vm358, %v489, %v490
      %492 = vrot.lane.b32.xlu0 %v491, 127
      %v493 = vpop.permute.xlu0 %492
      %v494 = vrot.slane %v493, 4
      %vm495 = vcmask 1039360
      %v496 = vsel %vm495, %v494, %v493
      %vm498 = vcmask 1044472
      %vm499 = vcmask 121860
      %vm500 = vmor %vm499, %vm498
      %501 = vst.msk [vmem:[#allocation2 + $0x4] sm:$0xff] %vm500, %v496
      %v502 = vld [vmem:[%s327 + $0x7] sm:$0x1]
      %v503 = vld [vmem:[%s327 + $0x17] sm:$0x1]
      %v504 = vld [vmem:[%s327 + $0x27] sm:$0x1]
      %v505 = vld [vmem:[%s327 + $0x37] sm:$0x1]
      %v510 = vrot.slane %v503, 7
      %v511 = vsel %vm346, %v510, %v502
      %v512 = vsel %vm348, %v510, %v511
      %v513 = vrot.slane %v504, 6
      %v514 = vsel %vm351, %v513, %v512
      %v515 = vsel %vm353, %v513, %v514
      %v516 = vrot.slane %v505, 5
      %v517 = vsel %vm356, %v516, %v515
      %v518 = vsel %vm358, %v516, %v517
      %519 = vrot.lane.b32.xlu0 %v518, 17
      %v520 = vpop.permute.xlu0 %519
      %vm522 = vcmask 265352
      %523 = vst.msk [vmem:[#allocation2 + $0x8] sm:$0xf] %vm522, %v520
      %v524 = vld [vmem:[%s327 + $0x8] sm:$0x1]
      %v525 = vld [vmem:[%s327 + $0x18] sm:$0x1]
      %v526 = vld [vmem:[%s327 + $0x28] sm:$0x1]
      %v527 = vld [vmem:[%s327 + $0x38] sm:$0x1]
      %v532 = vrot.slane %v525, 7
      %v533 = vsel %vm346, %v532, %v524
      %v534 = vsel %vm348, %v532, %v533
      %v535 = vrot.slane %v526, 6
      %v536 = vsel %vm351, %v535, %v534
      %v537 = vsel %vm353, %v535, %v536
      %v538 = vrot.slane %v527, 5
      %v539 = vsel %vm356, %v538, %v537
      %v540 = vsel %vm358, %v538, %v539
      %541 = vrot.lane.b32.xlu0 %v540, 35
      %v542 = vpop.permute.xlu0 %541
      %vm544 = vcmask 412952
      %545 = vst.msk [vmem:[#allocation2 + $0x8] sm:$0xf] %vm544, %v542
      %v546 = vld [vmem:[%s327 + $0x9] sm:$0x1]
      %v547 = vld [vmem:[%s327 + $0x19] sm:$0x1]
      %v548 = vld [vmem:[%s327 + $0x29] sm:$0x1]
      %v549 = vld [vmem:[%s327 + $0x39] sm:$0x1]
      %v554 = vrot.slane %v547, 7
      %v555 = vsel %vm346, %v554, %v546
      %v556 = vsel %vm348, %v554, %v555
      %v557 = vrot.slane %v548, 6
      %v558 = vsel %vm351, %v557, %v556
      %v559 = vsel %vm353, %v557, %v558
      %v560 = vrot.slane %v549, 5
      %v561 = vsel %vm356, %v560, %v559
      %v562 = vsel %vm358, %v560, %v561
      %563 = vrot.lane.b32.xlu0 %v562, 53
      %v564 = vpop.permute.xlu0 %563
      %vm566 = vcmask 560552
      %567 = vst.msk [vmem:[#allocation2 + $0x8] sm:$0xf] %vm566, %v564
      %v568 = vld [vmem:[%s327 + $0xa] sm:$0x1]
      %v569 = vld [vmem:[%s327 + $0x1a] sm:$0x1]
      %v570 = vld [vmem:[%s327 + $0x2a] sm:$0x1]
      %v571 = vld [vmem:[%s327 + $0x3a] sm:$0x1]
      %v576 = vrot.slane %v569, 7
      %v577 = vsel %vm346, %v576, %v568
      %v578 = vsel %vm348, %v576, %v577
      %v579 = vrot.slane %v570, 6
      %v580 = vsel %vm351, %v579, %v578
      %v581 = vsel %vm353, %v579, %v580
      %v582 = vrot.slane %v571, 5
      %v583 = vsel %vm356, %v582, %v581
      %v584 = vsel %vm358, %v582, %v583
      %585 = vrot.lane.b32.xlu0 %v584, 71
      %v586 = vpop.permute.xlu0 %585
      %vm588 = vcmask 708152
      %589 = vst.msk [vmem:[#allocation2 + $0x8] sm:$0xf] %vm588, %v586
      %v590 = vld [vmem:[%s327 + $0xb] sm:$0x1]
      %v591 = vld [vmem:[%s327 + $0x1b] sm:$0x1]
      %v592 = vld [vmem:[%s327 + $0x2b] sm:$0x1]
      %v593 = vld [vmem:[%s327 + $0x3b] sm:$0x1]
      %v598 = vrot.slane %v591, 7
      %v599 = vsel %vm346, %v598, %v590
      %v600 = vsel %vm348, %v598, %v599
      %v601 = vrot.slane %v592, 6
      %v602 = vsel %vm351, %v601, %v600
      %v603 = vsel %vm353, %v601, %v602
      %v604 = vrot.slane %v593, 5
      %v605 = vsel %vm356, %v604, %v603
      %v606 = vsel %vm358, %v604, %v605
      %607 = vrot.lane.b32.xlu0 %v606, 89
      %v608 = vpop.permute.xlu0 %607
      %vm610 = vcmask 855752
      %611 = vst.msk [vmem:[#allocation2 + $0x8] sm:$0xf] %vm610, %v608
      %v612 = vld [vmem:[%s327 + $0xc] sm:$0x1]
      %v613 = vld [vmem:[%s327 + $0x1c] sm:$0x1]
      %v614 = vld [vmem:[%s327 + $0x2c] sm:$0x1]
      %v615 = vld [vmem:[%s327 + $0x3c] sm:$0x1]
      %v620 = vrot.slane %v613, 7
      %v621 = vsel %vm346, %v620, %v612
      %v622 = vsel %vm348, %v620, %v621
      %v623 = vrot.slane %v614, 6
      %v624 = vsel %vm351, %v623, %v622
      %v625 = vsel %vm353, %v623, %v624
      %v626 = vrot.slane %v615, 5
      %v627 = vsel %vm356, %v626, %v625
      %v628 = vsel %vm358, %v626, %v627
      %629 = vrot.lane.b32.xlu0 %v628, 107
      %v630 = vpop.permute.xlu0 %629
      %vm632 = vcmask 1003352
      %633 = vst.msk [vmem:[#allocation2 + $0x8] sm:$0xf] %vm632, %v630
      %v634 = vld [vmem:[%s327 + $0xd] sm:$0x1]
      %v635 = vld [vmem:[%s327 + $0x1d] sm:$0x1]
      %v636 = vld [vmem:[%s327 + $0x2d] sm:$0x1]
      %v637 = vld [vmem:[%s327 + $0x3d] sm:$0x1]
      %v642 = vrot.slane %v635, 7
      %v643 = vsel %vm346, %v642, %v634
      %v644 = vsel %vm348, %v642, %v643
      %v645 = vrot.slane %v636, 6
      %v646 = vsel %vm351, %v645, %v644
      %v647 = vsel %vm353, %v645, %v646
      %v648 = vrot.slane %v637, 5
      %v649 = vsel %vm356, %v648, %v647
      %v650 = vsel %vm358, %v648, %v649
      %651 = vrot.lane.b32.xlu0 %v650, 125
      %v652 = vpop.permute.xlu0 %651
      %v653 = vrot.slane %v652, 4
      %vm654 = vcmask 1022976
      %v655 = vsel %vm654, %v653, %v652
      %vm657 = vcmask 1044456
      %vm658 = vcmask 105476
      %vm659 = vmor %vm658, %vm657
      %660 = vst.msk [vmem:[#allocation2 + $0x8] sm:$0xff] %vm659, %v655
      %v661 = vld [vmem:[%s327 + $0xe] sm:$0x1]
      %v662 = vld [vmem:[%s327 + $0x1e] sm:$0x1]
      %v663 = vld [vmem:[%s327 + $0x2e] sm:$0x1]
      %v664 = vld [vmem:[%s327 + $0x3e] sm:$0x1]
      %v669 = vrot.slane %v662, 7
      %v670 = vsel %vm346, %v669, %v661
      %v671 = vsel %vm348, %v669, %v670
      %v672 = vrot.slane %v663, 6
      %v673 = vsel %vm351, %v672, %v671
      %v674 = vsel %vm353, %v672, %v673
      %v675 = vrot.slane %v664, 5
      %v676 = vsel %vm356, %v675, %v674
      %v677 = vsel %vm358, %v675, %v676
      %678 = vrot.lane.b32.xlu0 %v677, 15
      %v679 = vpop.permute.xlu0 %678
      %vm681 = vcmask 248952
      %682 = vst.msk [vmem:[#allocation2 + $0xc] sm:$0xf] %vm681, %v679
      %v683 = vld [vmem:[%s327 + $0xf] sm:$0x1]
      %v684 = vld [vmem:[%s327 + $0x1f] sm:$0x1]
      %v685 = vld [vmem:[%s327 + $0x2f] sm:$0x1]
      %v686 = vld [vmem:[%s327 + $0x3f] sm:$0x1]
      %v691 = vrot.slane %v684, 7
      %v692 = vsel %vm346, %v691, %v683
      %v693 = vsel %vm348, %v691, %v692
      %v694 = vrot.slane %v685, 6
      %v695 = vsel %vm351, %v694, %v693
      %v696 = vsel %vm353, %v694, %v695
      %v697 = vrot.slane %v686, 5
      %v698 = vsel %vm356, %v697, %v696
      %v699 = vsel %vm358, %v697, %v698
      %700 = vrot.lane.b32.xlu0 %v699, 33
      %v701 = vpop.permute.xlu0 %700
      %vm703 = vcmask 396552
      %704 = vst.msk [vmem:[#allocation2 + $0xc] sm:$0xf] %vm703, %v701
      %v705 = vlaneseq
      %v706 = vand.u32 %v705, 127
      %v707 = vadd.s32 %v706, 128
      %v708 = vadd.s32 %v706, 256
      %v709 = vcvt.s32.f32 %v706
      %v710 = vcvt.s32.f32 %v707
      %v711 = vcvt.s32.f32 %v708
      %v712 = vmul.f32 %v709, 0.055555556
      %v713 = vmul.f32 %v710, 0.055555556
      %v714 = vmul.f32 %v711, 0.055555556
      %v715 = vfloor.f32 %v712
      %v716 = vfloor.f32 %v713
      %v717 = vfloor.f32 %v714
      %v718 = vmul.f32 %v715, 18.0
      %v719 = vmul.f32 %v716, 18.0
      %v720 = vmul.f32 %v717, 18.0
      %v721 = vsub.f32 %v709, %v718
      %v722 = vsub.f32 %v710, %v719
      %v723 = vsub.f32 %v711, %v720
      %vm724 = vcmp.ge.f32.partialorder %v715, 1.0
      %vm725 = vcmp.ge.f32.partialorder %v716, 1.0
      %vm726 = vcmp.ge.f32.partialorder %v717, 1.0
      %vm727 = vcmp.le.f32.partialorder %v715, 16.0
      %vm728 = vcmp.le.f32.partialorder %v716, 16.0
      %vm729 = vcmp.le.f32.partialorder %v717, 16.0
      %vm730 = vmand %vm724, %vm727
      %vm731 = vmand %vm725, %vm728
      %vm732 = vmand %vm726, %vm729
      %vm733 = vcmp.ge.f32.partialorder %v721, 1.0
      %vm734 = vcmp.ge.f32.partialorder %v722, 1.0
      %vm735 = vcmp.ge.f32.partialorder %v723, 1.0
      %vm736 = vmand %vm730, %vm733
      %vm737 = vmand %vm731, %vm734
      %vm738 = vmand %vm732, %vm735
      %vm739 = vcmp.le.f32.partialorder %v721, 16.0
      %vm740 = vcmp.le.f32.partialorder %v722, 16.0
      %vm741 = vcmp.le.f32.partialorder %v723, 16.0
      %vm742 = vmand %vm736, %vm739
      %vm743 = vmand %vm737, %vm740
      %vm744 = vmand %vm738, %vm741
      %v745 = vld [vmem:[#allocation2 + $0x4] sm:$0xff]
      %v746 = vld [vmem:[#allocation2 + $0xc] sm:$0xf]
      %v747 = vsel %vm742, 1, 0
      %v748 = vsel %vm743, 1, 0
      %v749 = vsel %vm744, 1, 0
      %vm750 = vcmp.eq.s32.totalorder %v747, 1
      %vm751 = vcmp.eq.s32.totalorder %v748, 1
      %vm752 = vcmp.eq.s32.totalorder %v749, 1
      %755 = vst [vmem:[#allocation1] ss:$2 sm:$0xff] %v745
      %s756 = scalar_lea.vmem [#allocation1], 16
      %757 = vst [vmem:[%s756] ss:$2 sm:$0xff] %v746
      %v758 = vld.sshfl [vmem:[#allocation1] sm:$0xff pattern:$0x75316420]
      %v759 = vld.sshfl [vmem:[#allocation1 + $0x8] sm:$0xff pattern:$0x75316420]
      %v760 = vld.sshfl [vmem:[#allocation1 + $0x10] sm:$0xff pattern:$0x75316420]
      %v764 = vsel %vm750, %v758, 0.0
      %v765 = vsel %vm751, %v759, 0.0
      %v766 = vsel %vm752, %v760, 0.0
      %v767 = vld [vmem:[%s1] sm:$0xf]
      %v768 = vld [vmem:[%s1 + $0x4] sm:$0xf]
      %v769 = vld [vmem:[%s1 + $0x8] sm:$0xf]
      %v770 = vpack.c.bf16 %v764, %v764
      %v771 = vpack.c.bf16 %v765, %v765
      %v772 = vpack.c.bf16 %v766, %v766
      %v773 = vld [vmem:[%s2] sm:$0xff]
      %v774 = vld [vmem:[%s2 + $0x8] sm:$0xff]
      %v775 = vld [vmem:[%s2 + $0x10] sm:$0xff]
      %777 = vset.pattern.permute.xlu0 0
      %778 = vperm.xlu0 %777, %v773
      %v779 = vpop.permute.xlu0 %778
      %782 = vset.pattern.permute.xlu0 0
      %783 = vperm.xlu0 %782, %v774
      %v784 = vpop.permute.xlu0 %783
      %787 = vset.pattern.permute.xlu0 0
      %788 = vperm.xlu0 %787, %v775
      %v789 = vpop.permute.xlu0 %788
      %v794 = vunpack.c.l.b16 %v767
      %v795 = vunpack.c.l.b16 %v768
      %v796 = vunpack.c.l.b16 %v769
      %v797 = vpack.c.b16 %v795, %v794
      %v798 = vpack.c.b16 %v796, %v796
      %vm799 = vcmask 31744
      %v801 = vsel %vm799, %v797, 0
      %v804 = vsel %vm799, %v798, 0
      %vm806 = vcmask 1041408
      %v808 = vsel %vm806, %v770, 0
      %v811 = vsel %vm806, %v771, 0
      %v814 = vsel %vm806, %v772, 0
      %816 = vmatpush.bf16.msra.mxu0 0
      %817 = vmatpush.bf16.msra.mxu0 0
      %818 = vmatpush.bf16.msra.mxu0 0
      %819 = vmatpush.bf16.msra.mxu0 0
      %820 = vmatpush.bf16.msra.mxu0 0
      %821 = vmatpush.bf16.msra.mxu0 0
      %822 = vmatpush.bf16.msra.mxu0 0
      %823 = vmatpush.bf16.msra.mxu0 %v808
      %824 = vmatmul.bf16.gmra.mxu0 %v801
      %v825 = vpop.f32.mrf.mxu0
      %v826 = vadd.f32 %v779, %v825
      %v827 = vpop.f32.mrf.mxu0
      %v828 = vadd.f32 %v784, %v827
      %829 = vmatmul.bf16.gmra.mxu0 %v804
      %v830 = vpop.f32.mrf.mxu0
      %v831 = vadd.f32 %v789, %v830
      %v832 = vpop.f32.mrf.mxu0
      %833 = vdwg.mxu0
      %834 = vmatpush.bf16.msra.mxu0 0
      %835 = vmatpush.bf16.msra.mxu0 0
      %836 = vmatpush.bf16.msra.mxu0 0
      %837 = vmatpush.bf16.msra.mxu0 0
      %838 = vmatpush.bf16.msra.mxu0 0
      %839 = vmatpush.bf16.msra.mxu0 0
      %840 = vmatpush.bf16.msra.mxu0 0
      %841 = vmatpush.bf16.msra.mxu0 %v811
      %842 = vmatmul.bf16.gmra.mxu0 %v801
      %v843 = vpop.f32.mrf.mxu0
      %v844 = vadd.f32 %v779, %v843
      %v845 = vpop.f32.mrf.mxu0
      %v846 = vadd.f32 %v784, %v845
      %847 = vmatmul.bf16.gmra.mxu0 %v804
      %v848 = vpop.f32.mrf.mxu0
      %v849 = vadd.f32 %v789, %v848
      %v850 = vpop.f32.mrf.mxu0
      %851 = vdwg.mxu0
      %852 = vmatpush.bf16.msra.mxu0 0
      %853 = vmatpush.bf16.msra.mxu0 0
      %854 = vmatpush.bf16.msra.mxu0 0
      %855 = vmatpush.bf16.msra.mxu0 0
      %856 = vmatpush.bf16.msra.mxu0 0
      %857 = vmatpush.bf16.msra.mxu0 0
      %858 = vmatpush.bf16.msra.mxu0 0
      %859 = vmatpush.bf16.msra.mxu0 %v814
      %860 = vmatmul.bf16.gmra.mxu0 %v801
      %v861 = vpop.f32.mrf.mxu0
      %v862 = vadd.f32 %v779, %v861
      %v863 = vpop.f32.mrf.mxu0
      %v864 = vadd.f32 %v784, %v863
      %865 = vmatmul.bf16.gmra.mxu0 %v804
      %v866 = vpop.f32.mrf.mxu0
      %v867 = vadd.f32 %v789, %v866
      %v868 = vpop.f32.mrf.mxu0
      %869 = vdwg.mxu0
      %v870 = vmax.f32 %v826, 0.0
      %v871 = vmax.f32 %v844, 0.0
      %v872 = vmax.f32 %v862, 0.0
      %v873 = vmax.f32 %v828, 0.0
      %v874 = vmax.f32 %v846, 0.0
      %v875 = vmax.f32 %v864, 0.0
      %v876 = vmax.f32 %v831, 0.0
      %v877 = vmax.f32 %v849, 0.0
      %v878 = vmax.f32 %v867, 0.0
      %879 = vst [vmem:[%s332] sm:$0xff] %v870
      %880 = vst [vmem:[%s332 + $0x8] sm:$0xff] %v871
      %881 = vst [vmem:[%s332 + $0x10] sm:$0xff] %v872
      %882 = vst [vmem:[#allocation3] sm:$0xff] 0.0
      %883 = vst [vmem:[#allocation3 + $0x28] sm:$0xff] 0.0
      %884 = vst [vmem:[#allocation3 + $0x20] sm:$0xff] 0.0
      %885 = vst [vmem:[#allocation3 + $0x48] sm:$0xff] 0.0
      %v886 = vsel %vm750, %v873, 0.0
      %v887 = vsel %vm751, %v874, 0.0
      %v888 = vsel %vm752, %v875, 0.0
      %v889 = vsel %vm750, %v876, 0.0
      %v890 = vsel %vm751, %v877, 0.0
      %v891 = vsel %vm752, %v878, 0.0
      %892 = vst [vmem:[#allocation3 + $0x8] sm:$0xff] %v886
      %893 = vst [vmem:[#allocation3 + $0x10] sm:$0xff] %v887
      %894 = vst [vmem:[#allocation3 + $0x18] sm:$0xff] %v888
      %895 = vst [vmem:[#allocation3 + $0x30] sm:$0xff] %v889
      %896 = vst [vmem:[#allocation3 + $0x38] sm:$0xff] %v890
      %897 = vst [vmem:[#allocation3 + $0x40] sm:$0xff] %v891
      %v898 = vld [vmem:[#allocation2] sm:$0xff]
      %v899 = vld [vmem:[#allocation2 + $0x8] sm:$0xff]
      %902 = vrot.lane.b32.xlu0 %v898, 127
      %v903 = vpop.permute.xlu0 %902
      %904 = vrot.lane.b32.xlu0 %v899, 127
      %v905 = vpop.permute.xlu0 %904
      %v906 = vrot.slane %v903, 4
      %v907 = vrot.slane %v905, 4
      %vm908 = vcmask 1043456
      %v909 = vsel %vm908, %v906, %v907
      %v910 = vsel %vm495, %v903, %v909
      %v911 = vsel %vm495, %v905, %v907
      %v914 = vmax.f32 %v898, %v910
      %v915 = vmax.f32 %v899, %v911
      %916 = vrot.lane.b32.xlu0 %v898, 126
      %v917 = vpop.permute.xlu0 %916
      %918 = vrot.lane.b32.xlu0 %v899, 126
      %v919 = vpop.permute.xlu0 %918
      %v920 = vrot.slane %v917, 4
      %v921 = vrot.slane %v919, 4
      %v922 = vsel %vm908, %v920, %v921
      %vm923 = vcmask 1031168
      %v924 = vsel %vm923, %v917, %v922
      %v925 = vsel %vm923, %v919, %v921
      %v928 = vmax.f32 %v914, %v924
      %v929 = vmax.f32 %v915, %v925
      %930 = vrot.lane.b32.xlu0 %v898, 110
      %v931 = vpop.permute.xlu0 %930
      %932 = vrot.lane.b32.xlu0 %v899, 110
      %v933 = vpop.permute.xlu0 %932
      %v934 = vrot.slane %v931, 4
      %v935 = vrot.slane %v933, 4
      %v936 = vsel %vm908, %v934, %v935
      %vm937 = vcmask 900096
      %v938 = vsel %vm937, %v931, %v936
      %v939 = vsel %vm937, %v933, %v935
      %v942 = vmax.f32 %v928, %v938
      %v943 = vmax.f32 %v929, %v939
      %v944 = vld [vmem:[#allocation2 + $0x4] sm:$0xff]
      %v945 = vld [vmem:[#allocation2 + $0xc] sm:$0xf]
      %948 = vrot.lane.b32.xlu0 %v944, 109
      %v949 = vpop.permute.xlu0 %948
      %950 = vrot.lane.b32.xlu0 %v945, 109
      %v951 = vpop.permute.xlu0 %950
      %v952 = vrot.slane %v949, 4
      %v953 = vrot.slane %v951, 4
      %vm954 = vcmask 891904
      %v955 = vsel %vm954, %v952, %v949
      %v956 = vsel %vm908, %v952, %v953
      %v957 = vsel %vm954, %v956, %v951
      %v960 = vmax.f32 %v942, %v955
      %v961 = vmax.f32 %v943, %v957
      %v962 = vld [vmem:[#allocation2 + $0x4] sm:$0xff]
      %v963 = vld [vmem:[#allocation2 + $0xc] sm:$0xff]
      %966 = vrot.lane.b32.xlu0 %v962, 108
      %v967 = vpop.permute.xlu0 %966
      %968 = vrot.lane.b32.xlu0 %v963, 108
      %v969 = vpop.permute.xlu0 %968
      %v970 = vrot.slane %v967, 4
      %v971 = vrot.slane %v969, 4
      %vm972 = vcmask 883712
      %v973 = vsel %vm972, %v970, %v967
      %v974 = vsel %vm908, %v970, %v971
      %v975 = vsel %vm972, %v974, %v969
      %v978 = vmax.f32 %v960, %v973
      %v979 = vmax.f32 %v961, %v975
      %980 = vrot.lane.b32.xlu0 %v962, 92
      %v981 = vpop.permute.xlu0 %980
      %982 = vrot.lane.b32.xlu0 %v963, 92
      %v983 = vpop.permute.xlu0 %982
      %v984 = vrot.slane %v981, 4
      %v985 = vrot.slane %v983, 4
      %vm986 = vcmask 752640
      %v987 = vsel %vm986, %v984, %v981
      %v988 = vsel %vm908, %v984, %v985
      %v989 = vsel %vm986, %v988, %v983
      %v992 = vmax.f32 %v978, %v987
      %v993 = vmax.f32 %v979, %v989
      %994 = vrot.lane.b32.xlu0 %v962, 91
      %v995 = vpop.permute.xlu0 %994
      %996 = vrot.lane.b32.xlu0 %v963, 91
      %v997 = vpop.permute.xlu0 %996
      %v998 = vrot.slane %v995, 4
      %v999 = vrot.slane %v997, 4
      %vm1000 = vcmask 744448
      %v1001 = vsel %vm1000, %v998, %v995
      %v1002 = vsel %vm908, %v998, %v999
      %v1003 = vsel %vm1000, %v1002, %v997
      %v1006 = vmax.f32 %v992, %v1001
      %v1007 = vmax.f32 %v993, %v1003
      %1008 = vrot.lane.b32.xlu0 %v962, 90
      %v1009 = vpop.permute.xlu0 %1008
      %1010 = vrot.lane.b32.xlu0 %v963, 90
      %v1011 = vpop.permute.xlu0 %1010
      %v1012 = vrot.slane %v1009, 4
      %v1013 = vrot.slane %v1011, 4
      %vm1014 = vcmask 736256
      %v1015 = vsel %vm1014, %v1012, %v1009
      %v1016 = vsel %vm908, %v1012, %v1013
      %v1017 = vsel %vm1014, %v1016, %v1011
      %v1020 = vmax.f32 %v1006, %v1015
      %v1021 = vmax.f32 %v1007, %v1017
      %1024 = vst [vmem:[#allocation1] ss:$2 sm:$0xff] %v1020
      %s1025 = scalar_lea.vmem [#allocation1], 16
      %1026 = vst [vmem:[%s1025] ss:$2 sm:$0xff] %v1021
      %v1027 = vld.sshfl [vmem:[#allocation1] sm:$0xff pattern:$0x75316420]
      %v1028 = vld.sshfl [vmem:[#allocation1 + $0x8] sm:$0xff pattern:$0x75316420]
      %v1029 = vld.sshfl [vmem:[#allocation1 + $0x10] sm:$0xff pattern:$0x75316420]
      %v1030 = vld.sshfl [vmem:[#allocation1 + $0x18] sm:$0xff pattern:$0x75316420]
      %1031 = vrot.lane.b32.xlu0 %v1027, 19
      %v1032 = vpop.permute.xlu0 %1031
      %1033 = vrot.lane.b32.xlu0 %v1028, 19
      %v1034 = vpop.permute.xlu0 %1033
      %1035 = vrot.lane.b32.xlu0 %v1029, 19
      %v1036 = vpop.permute.xlu0 %1035
      %1037 = vrot.lane.b32.xlu0 %v1030, 19
      %v1038 = vpop.permute.xlu0 %1037
      %vm1039 = vcmask 154624
      %v1040 = vsel %vm1039, %v1032, %v1034
      %v1041 = vsel %vm1039, %v1034, %v1036
      %v1042 = vsel %vm1039, %v1036, %v1038
      %v1046 = vsel %vm750, %v1040, 0.0
      %v1047 = vsel %vm751, %v1041, 0.0
      %v1048 = vsel %vm752, %v1042, 0.0
      %v1049 = vld [vmem:[%s3] sm:$0xf]
      %v1050 = vpack.c.bf16 %v1046, %v1046
      %v1051 = vpack.c.bf16 %v1047, %v1047
      %v1052 = vpack.c.bf16 %v1048, %v1048
      %v1053 = vld [vmem:[%s4] sm:$0xff]
      %1055 = vset.pattern.permute.xlu0 0
      %1056 = vperm.xlu0 %1055, %v1053
      %v1057 = vpop.permute.xlu0 %1056
      %v1060 = vsel %vm799, %v1049, 0
      %v1063 = vsel %vm806, %v1050, 0
      %v1066 = vsel %vm806, %v1051, 0
      %v1069 = vsel %vm806, %v1052, 0
      %1071 = vmatpush.bf16.msra.mxu0 0
      %1072 = vmatpush.bf16.msra.mxu0 0
      %1073 = vmatpush.bf16.msra.mxu0 0
      %1074 = vmatpush.bf16.msra.mxu0 0
      %1075 = vmatpush.bf16.msra.mxu0 0
      %1076 = vmatpush.bf16.msra.mxu0 0
      %1077 = vmatpush.bf16.msra.mxu0 0
      %1078 = vmatpush.bf16.msra.mxu0 %v1063
      %1079 = vmatmul.bf16.gmra.mxu0 %v1060
      %v1080 = vpop.f32.mrf.mxu0
      %v1081 = vadd.f32 %v1057, %v1080
      %v1082 = vpop.f32.mrf.mxu0
      %1083 = vdwg.mxu0
      %1084 = vmatpush.bf16.msra.mxu0 0
      %1085 = vmatpush.bf16.msra.mxu0 0
      %1086 = vmatpush.bf16.msra.mxu0 0
      %1087 = vmatpush.bf16.msra.mxu0 0
      %1088 = vmatpush.bf16.msra.mxu0 0
      %1089 = vmatpush.bf16.msra.mxu0 0
      %1090 = vmatpush.bf16.msra.mxu0 0
      %1091 = vmatpush.bf16.msra.mxu0 %v1066
      %1092 = vmatmul.bf16.gmra.mxu0 %v1060
      %v1093 = vpop.f32.mrf.mxu0
      %v1094 = vadd.f32 %v1057, %v1093
      %v1095 = vpop.f32.mrf.mxu0
      %1096 = vdwg.mxu0
      %1097 = vmatpush.bf16.msra.mxu0 0
      %1098 = vmatpush.bf16.msra.mxu0 0
      %1099 = vmatpush.bf16.msra.mxu0 0
      %1100 = vmatpush.bf16.msra.mxu0 0
      %1101 = vmatpush.bf16.msra.mxu0 0
      %1102 = vmatpush.bf16.msra.mxu0 0
      %1103 = vmatpush.bf16.msra.mxu0 0
      %1104 = vmatpush.bf16.msra.mxu0 %v1069
      %1105 = vmatmul.bf16.gmra.mxu0 %v1060
      %v1106 = vpop.f32.mrf.mxu0
      %v1107 = vadd.f32 %v1057, %v1106
      %v1108 = vpop.f32.mrf.mxu0
      %1109 = vdwg.mxu0
      %v1110 = vmax.f32 %v1081, 0.0
      %v1111 = vmax.f32 %v1094, 0.0
      %v1112 = vmax.f32 %v1107, 0.0
      %1113 = vst [vmem:[%s332 + $0x48] sm:$0xff] %v1110
      %1114 = vst [vmem:[%s332 + $0x50] sm:$0xff] %v1111
      %1115 = vst [vmem:[%s332 + $0x58] sm:$0xff] %v1112
      %v1116 = vld [vmem:[#allocation3] sm:$0xff]
      %v1117 = vld [vmem:[#allocation3 + $0x8] sm:$0xff]
      %v1118 = vld [vmem:[#allocation3 + $0x10] sm:$0xff]
      %v1119 = vld [vmem:[#allocation3 + $0x18] sm:$0xff]
      %v1120 = vld [vmem:[#allocation3 + $0x28] sm:$0xff]
      %v1121 = vld [vmem:[#allocation3 + $0x30] sm:$0xff]
      %v1122 = vld [vmem:[#allocation3 + $0x38] sm:$0xff]
      %v1123 = vld [vmem:[#allocation3 + $0x40] sm:$0xff]
      %1132 = vrot.lane.b32.xlu0 %v1116, 19
      %v1133 = vpop.permute.xlu0 %1132
      %1134 = vrot.lane.b32.xlu0 %v1117, 19
      %v1135 = vpop.permute.xlu0 %1134
      %1136 = vrot.lane.b32.xlu0 %v1118, 19
      %v1137 = vpop.permute.xlu0 %1136
      %1138 = vrot.lane.b32.xlu0 %v1119, 19
      %v1139 = vpop.permute.xlu0 %1138
      %1140 = vrot.lane.b32.xlu0 %v1120, 19
      %v1141 = vpop.permute.xlu0 %1140
      %1142 = vrot.lane.b32.xlu0 %v1121, 19
      %v1143 = vpop.permute.xlu0 %1142
      %1144 = vrot.lane.b32.xlu0 %v1122, 19
      %v1145 = vpop.permute.xlu0 %1144
      %1146 = vrot.lane.b32.xlu0 %v1123, 19
      %v1147 = vpop.permute.xlu0 %1146
      %v1148 = vsel %vm1039, %v1133, %v1135
      %v1149 = vsel %vm1039, %v1135, %v1137
      %v1150 = vsel %vm1039, %v1137, %v1139
      %v1151 = vsel %vm1039, %v1141, %v1143
      %v1152 = vsel %vm1039, %v1143, %v1145
      %v1153 = vsel %vm1039, %v1145, %v1147
      %1160 = vst [vmem:[#allocation4] sm:$0xff] %v1148
      %1161 = vst [vmem:[#allocation4 + $0x8] sm:$0xff] %v1149
      %1162 = vst [vmem:[#allocation4 + $0x10] sm:$0xff] %v1150
      %1163 = vst [vmem:[#allocation4 + $0x18] sm:$0xff] %v1151
      %1164 = vst [vmem:[#allocation4 + $0x20] sm:$0xff] %v1152
      %1165 = vst [vmem:[#allocation4 + $0x28] sm:$0xff] %v1153
      %v1166 = vld [vmem:[#allocation3] sm:$0xff]
      %v1167 = vld [vmem:[#allocation3 + $0x8] sm:$0xff]
      %v1168 = vld [vmem:[#allocation3 + $0x10] sm:$0xff]
      %v1169 = vld [vmem:[#allocation3 + $0x18] sm:$0xff]
      %v1170 = vld [vmem:[#allocation3 + $0x28] sm:$0xff]
      %v1171 = vld [vmem:[#allocation3 + $0x30] sm:$0xff]
      %v1172 = vld [vmem:[#allocation3 + $0x38] sm:$0xff]
      %v1173 = vld [vmem:[#allocation3 + $0x40] sm:$0xff]
      %1182 = vrot.lane.b32.xlu0 %v1166, 18
      %v1183 = vpop.permute.xlu0 %1182
      %1184 = vrot.lane.b32.xlu0 %v1167, 18
      %v1185 = vpop.permute.xlu0 %1184
      %1186 = vrot.lane.b32.xlu0 %v1168, 18
      %v1187 = vpop.permute.xlu0 %1186
      %1188 = vrot.lane.b32.xlu0 %v1169, 18
      %v1189 = vpop.permute.xlu0 %1188
      %1190 = vrot.lane.b32.xlu0 %v1170, 18
      %v1191 = vpop.permute.xlu0 %1190
      %1192 = vrot.lane.b32.xlu0 %v1171, 18
      %v1193 = vpop.permute.xlu0 %1192
      %1194 = vrot.lane.b32.xlu0 %v1172, 18
      %v1195 = vpop.permute.xlu0 %1194
      %1196 = vrot.lane.b32.xlu0 %v1173, 18
      %v1197 = vpop.permute.xlu0 %1196
      %vm1198 = vcmask 146432
      %v1199 = vsel %vm1198, %v1183, %v1185
      %v1200 = vsel %vm1198, %v1185, %v1187
      %v1201 = vsel %vm1198, %v1187, %v1189
      %v1202 = vsel %vm1198, %v1191, %v1193
      %v1203 = vsel %vm1198, %v1193, %v1195
      %v1204 = vsel %vm1198, %v1195, %v1197
      %1211 = vst [vmem:[#allocation4 + $0x30] sm:$0xff] %v1199
      %1212 = vst [vmem:[#allocation4 + $0x38] sm:$0xff] %v1200
      %1213 = vst [vmem:[#allocation4 + $0x40] sm:$0xff] %v1201
      %1214 = vst [vmem:[#allocation4 + $0x48] sm:$0xff] %v1202
      %1215 = vst [vmem:[#allocation4 + $0x50] sm:$0xff] %v1203
      %1216 = vst [vmem:[#allocation4 + $0x58] sm:$0xff] %v1204
      %v1217 = vld [vmem:[#allocation3] sm:$0xff]
      %v1218 = vld [vmem:[#allocation3 + $0x8] sm:$0xff]
      %v1219 = vld [vmem:[#allocation3 + $0x10] sm:$0xff]
      %v1220 = vld [vmem:[#allocation3 + $0x18] sm:$0xff]
      %v1221 = vld [vmem:[#allocation3 + $0x28] sm:$0xff]
      %v1222 = vld [vmem:[#allocation3 + $0x30] sm:$0xff]
      %v1223 = vld [vmem:[#allocation3 + $0x38] sm:$0xff]
      %v1224 = vld [vmem:[#allocation3 + $0x40] sm:$0xff]
      %1233 = vrot.lane.b32.xlu0 %v1217, 17
      %v1234 = vpop.permute.xlu0 %1233
      %1235 = vrot.lane.b32.xlu0 %v1218, 17
      %v1236 = vpop.permute.xlu0 %1235
      %1237 = vrot.lane.b32.xlu0 %v1219, 17
      %v1238 = vpop.permute.xlu0 %1237
      %1239 = vrot.lane.b32.xlu0 %v1220, 17
      %v1240 = vpop.permute.xlu0 %1239
      %1241 = vrot.lane.b32.xlu0 %v1221, 17
      %v1242 = vpop.permute.xlu0 %1241
      %1243 = vrot.lane.b32.xlu0 %v1222, 17
      %v1244 = vpop.permute.xlu0 %1243
      %1245 = vrot.lane.b32.xlu0 %v1223, 17
      %v1246 = vpop.permute.xlu0 %1245
      %1247 = vrot.lane.b32.xlu0 %v1224, 17
      %v1248 = vpop.permute.xlu0 %1247
      %vm1249 = vcmask 138240
      %v1250 = vsel %vm1249, %v1234, %v1236
      %v1251 = vsel %vm1249, %v1236, %v1238
      %v1252 = vsel %vm1249, %v1238, %v1240
      %v1253 = vsel %vm1249, %v1242, %v1244
      %v1254 = vsel %vm1249, %v1244, %v1246
      %v1255 = vsel %vm1249, %v1246, %v1248
      %1262 = vst [vmem:[#allocation4 + $0x60] sm:$0xff] %v1250
      %1263 = vst [vmem:[#allocation4 + $0x68] sm:$0xff] %v1251
      %1264 = vst [vmem:[#allocation4 + $0x70] sm:$0xff] %v1252
      %1265 = vst [vmem:[#allocation4 + $0x78] sm:$0xff] %v1253
      %1266 = vst [vmem:[#allocation4 + $0x80] sm:$0xff] %v1254
      %1267 = vst [vmem:[#allocation4 + $0x88] sm:$0xff] %v1255
      %v1268 = vld [vmem:[#allocation3] sm:$0xff]
      %v1269 = vld [vmem:[#allocation3 + $0x8] sm:$0xff]
      %v1270 = vld [vmem:[#allocation3 + $0x10] sm:$0xff]
      %v1271 = vld [vmem:[#allocation3 + $0x18] sm:$0xff]
      %v1272 = vld [vmem:[#allocation3 + $0x28] sm:$0xff]
      %v1273 = vld [vmem:[#allocation3 + $0x30] sm:$0xff]
      %v1274 = vld [vmem:[#allocation3 + $0x38] sm:$0xff]
      %v1275 = vld [vmem:[#allocation3 + $0x40] sm:$0xff]
      %1284 = vrot.lane.b32.xlu0 %v1268, 1
      %v1285 = vpop.permute.xlu0 %1284
      %1286 = vrot.lane.b32.xlu0 %v1269, 1
      %v1287 = vpop.permute.xlu0 %1286
      %1288 = vrot.lane.b32.xlu0 %v1270, 1
      %v1289 = vpop.permute.xlu0 %1288
      %1290 = vrot.lane.b32.xlu0 %v1271, 1
      %v1291 = vpop.permute.xlu0 %1290
      %1292 = vrot.lane.b32.xlu0 %v1272, 1
      %v1293 = vpop.permute.xlu0 %1292
      %1294 = vrot.lane.b32.xlu0 %v1273, 1
      %v1295 = vpop.permute.xlu0 %1294
      %1296 = vrot.lane.b32.xlu0 %v1274, 1
      %v1297 = vpop.permute.xlu0 %1296
      %1298 = vrot.lane.b32.xlu0 %v1275, 1
      %v1299 = vpop.permute.xlu0 %1298
      %vm1300 = vcmask 7168
      %v1301 = vsel %vm1300, %v1285, %v1287
      %v1302 = vsel %vm1300, %v1287, %v1289
      %v1303 = vsel %vm1300, %v1289, %v1291
      %v1304 = vsel %vm1300, %v1293, %v1295
      %v1305 = vsel %vm1300, %v1295, %v1297
      %v1306 = vsel %vm1300, %v1297, %v1299
      %1313 = vst [vmem:[#allocation4 + $0x90] sm:$0xff] %v1301
      %1314 = vst [vmem:[#allocation4 + $0x98] sm:$0xff] %v1302
      %1315 = vst [vmem:[#allocation4 + $0xa0] sm:$0xff] %v1303
      %1316 = vst [vmem:[#allocation4 + $0xa8] sm:$0xff] %v1304
      %1317 = vst [vmem:[#allocation4 + $0xb0] sm:$0xff] %v1305
      %1318 = vst [vmem:[#allocation4 + $0xb8] sm:$0xff] %v1306
      %v1319 = vld [vmem:[#allocation3 + $0x8] sm:$0xff]
      %v1320 = vld [vmem:[#allocation3 + $0x10] sm:$0xff]
      %v1321 = vld [vmem:[#allocation3 + $0x18] sm:$0xff]
      %v1322 = vld [vmem:[#allocation3 + $0x30] sm:$0xff]
      %v1323 = vld [vmem:[#allocation3 + $0x38] sm:$0xff]
      %v1324 = vld [vmem:[#allocation3 + $0x40] sm:$0xff]
      %1325 = vst [vmem:[#allocation4 + $0xc0] sm:$0xff] %v1319
      %1326 = vst [vmem:[#allocation4 + $0xc8] sm:$0xff] %v1320
      %1327 = vst [vmem:[#allocation4 + $0xd0] sm:$0xff] %v1321
      %1328 = vst [vmem:[#allocation4 + $0xd8] sm:$0xff] %v1322
      %1329 = vst [vmem:[#allocation4 + $0xe0] sm:$0xff] %v1323
      %1330 = vst [vmem:[#allocation4 + $0xe8] sm:$0xff] %v1324
      %v1331 = vld [vmem:[#allocation3 + $0x8] sm:$0xff]
      %v1332 = vld [vmem:[#allocation3 + $0x10] sm:$0xff]
      %v1333 = vld [vmem:[#allocation3 + $0x18] sm:$0xff]
      %v1334 = vld [vmem:[#allocation3 + $0x20] sm:$0xff]
      %v1335 = vld [vmem:[#allocation3 + $0x30] sm:$0xff]
      %v1336 = vld [vmem:[#allocation3 + $0x38] sm:$0xff]
      %v1337 = vld [vmem:[#allocation3 + $0x40] sm:$0xff]
      %v1338 = vld [vmem:[#allocation3 + $0x48] sm:$0xff]
      %1347 = vrot.lane.b32.xlu0 %v1331, 127
      %v1348 = vpop.permute.xlu0 %1347
      %1349 = vrot.lane.b32.xlu0 %v1332, 127
      %v1350 = vpop.permute.xlu0 %1349
      %1351 = vrot.lane.b32.xlu0 %v1333, 127
      %v1352 = vpop.permute.xlu0 %1351
      %1353 = vrot.lane.b32.xlu0 %v1334, 127
      %v1354 = vpop.permute.xlu0 %1353
      %1355 = vrot.lane.b32.xlu0 %v1335, 127
      %v1356 = vpop.permute.xlu0 %1355
      %1357 = vrot.lane.b32.xlu0 %v1336, 127
      %v1358 = vpop.permute.xlu0 %1357
      %1359 = vrot.lane.b32.xlu0 %v1337, 127
      %v1360 = vpop.permute.xlu0 %1359
      %1361 = vrot.lane.b32.xlu0 %v1338, 127
      %v1362 = vpop.permute.xlu0 %1361
      %v1363 = vsel %vm495, %v1348, %v1350
      %v1364 = vsel %vm495, %v1350, %v1352
      %v1365 = vsel %vm495, %v1352, %v1354
      %v1366 = vsel %vm495, %v1356, %v1358
      %v1367 = vsel %vm495, %v1358, %v1360
      %v1368 = vsel %vm495, %v1360, %v1362
      %1375 = vst [vmem:[#allocation4 + $0xf0] sm:$0xff] %v1363
      %1376 = vst [vmem:[#allocation4 + $0xf8] sm:$0xff] %v1364
      %1377 = vst [vmem:[#allocation4 + $0x100] sm:$0xff] %v1365
      %1378 = vst [vmem:[#allocation4 + $0x108] sm:$0xff] %v1366
      %1379 = vst [vmem:[#allocation4 + $0x110] sm:$0xff] %v1367
      %1380 = vst [vmem:[#allocation4 + $0x118] sm:$0xff] %v1368
      %v1381 = vld [vmem:[#allocation3 + $0x8] sm:$0xff]
      %v1382 = vld [vmem:[#allocation3 + $0x10] sm:$0xff]
      %v1383 = vld [vmem:[#allocation3 + $0x18] sm:$0xff]
      %v1384 = vld [vmem:[#allocation3 + $0x20] sm:$0xff]
      %v1385 = vld [vmem:[#allocation3 + $0x30] sm:$0xff]
      %v1386 = vld [vmem:[#allocation3 + $0x38] sm:$0xff]
      %v1387 = vld [vmem:[#allocation3 + $0x40] sm:$0xff]
      %v1388 = vld [vmem:[#allocation3 + $0x48] sm:$0xff]
      %1397 = vrot.lane.b32.xlu0 %v1381, 111
      %v1398 = vpop.permute.xlu0 %1397
      %1399 = vrot.lane.b32.xlu0 %v1382, 111
      %v1400 = vpop.permute.xlu0 %1399
      %1401 = vrot.lane.b32.xlu0 %v1383, 111
      %v1402 = vpop.permute.xlu0 %1401
      %1403 = vrot.lane.b32.xlu0 %v1384, 111
      %v1404 = vpop.permute.xlu0 %1403
      %1405 = vrot.lane.b32.xlu0 %v1385, 111
      %v1406 = vpop.permute.xlu0 %1405
      %1407 = vrot.lane.b32.xlu0 %v1386, 111
      %v1408 = vpop.permute.xlu0 %1407
      %1409 = vrot.lane.b32.xlu0 %v1387, 111
      %v1410 = vpop.permute.xlu0 %1409
      %1411 = vrot.lane.b32.xlu0 %v1388, 111
      %v1412 = vpop.permute.xlu0 %1411
      %vm1413 = vcmask 908288
      %v1414 = vsel %vm1413, %v1398, %v1400
      %v1415 = vsel %vm1413, %v1400, %v1402
      %v1416 = vsel %vm1413, %v1402, %v1404
      %v1417 = vsel %vm1413, %v1406, %v1408
      %v1418 = vsel %vm1413, %v1408, %v1410
      %v1419 = vsel %vm1413, %v1410, %v1412
      %1426 = vst [vmem:[#allocation4 + $0x120] sm:$0xff] %v1414
      %1427 = vst [vmem:[#allocation4 + $0x128] sm:$0xff] %v1415
      %1428 = vst [vmem:[#allocation4 + $0x130] sm:$0xff] %v1416
      %1429 = vst [vmem:[#allocation4 + $0x138] sm:$0xff] %v1417
      %1430 = vst [vmem:[#allocation4 + $0x140] sm:$0xff] %v1418
      %1431 = vst [vmem:[#allocation4 + $0x148] sm:$0xff] %v1419
      %v1432 = vld [vmem:[#allocation3 + $0x8] sm:$0xff]
      %v1433 = vld [vmem:[#allocation3 + $0x10] sm:$0xff]
      %v1434 = vld [vmem:[#allocation3 + $0x18] sm:$0xff]
      %v1435 = vld [vmem:[#allocation3 + $0x20] sm:$0xff]
      %v1436 = vld [vmem:[#allocation3 + $0x30] sm:$0xff]
      %v1437 = vld [vmem:[#allocation3 + $0x38] sm:$0xff]
      %v1438 = vld [vmem:[#allocation3 + $0x40] sm:$0xff]
      %v1439 = vld [vmem:[#allocation3 + $0x48] sm:$0xff]
      %1448 = vrot.lane.b32.xlu0 %v1432, 110
      %v1449 = vpop.permute.xlu0 %1448
      %1450 = vrot.lane.b32.xlu0 %v1433, 110
      %v1451 = vpop.permute.xlu0 %1450
      %1452 = vrot.lane.b32.xlu0 %v1434, 110
      %v1453 = vpop.permute.xlu0 %1452
      %1454 = vrot.lane.b32.xlu0 %v1435, 110
      %v1455 = vpop.permute.xlu0 %1454
      %1456 = vrot.lane.b32.xlu0 %v1436, 110
      %v1457 = vpop.permute.xlu0 %1456
      %1458 = vrot.lane.b32.xlu0 %v1437, 110
      %v1459 = vpop.permute.xlu0 %1458
      %1460 = vrot.lane.b32.xlu0 %v1438, 110
      %v1461 = vpop.permute.xlu0 %1460
      %1462 = vrot.lane.b32.xlu0 %v1439, 110
      %v1463 = vpop.permute.xlu0 %1462
      %v1464 = vsel %vm937, %v1449, %v1451
      %v1465 = vsel %vm937, %v1451, %v1453
      %v1466 = vsel %vm937, %v1453, %v1455
      %v1467 = vsel %vm937, %v1457, %v1459
      %v1468 = vsel %vm937, %v1459, %v1461
      %v1469 = vsel %vm937, %v1461, %v1463
      %1476 = vst [vmem:[#allocation4 + $0x150] sm:$0xff] %v1464
      %1477 = vst [vmem:[#allocation4 + $0x158] sm:$0xff] %v1465
      %1478 = vst [vmem:[#allocation4 + $0x160] sm:$0xff] %v1466
      %1479 = vst [vmem:[#allocation4 + $0x168] sm:$0xff] %v1467
      %1480 = vst [vmem:[#allocation4 + $0x170] sm:$0xff] %v1468
      %1481 = vst [vmem:[#allocation4 + $0x178] sm:$0xff] %v1469
      %v1482 = vld [vmem:[#allocation3 + $0x8] sm:$0xff]
      %v1483 = vld [vmem:[#allocation3 + $0x10] sm:$0xff]
      %v1484 = vld [vmem:[#allocation3 + $0x18] sm:$0xff]
      %v1485 = vld [vmem:[#allocation3 + $0x20] sm:$0xff]
      %v1486 = vld [vmem:[#allocation3 + $0x30] sm:$0xff]
      %v1487 = vld [vmem:[#allocation3 + $0x38] sm:$0xff]
      %v1488 = vld [vmem:[#allocation3 + $0x40] sm:$0xff]
      %v1489 = vld [vmem:[#allocation3 + $0x48] sm:$0xff]
      %1498 = vrot.lane.b32.xlu0 %v1482, 109
      %v1499 = vpop.permute.xlu0 %1498
      %1500 = vrot.lane.b32.xlu0 %v1483, 109
      %v1501 = vpop.permute.xlu0 %1500
      %1502 = vrot.lane.b32.xlu0 %v1484, 109
      %v1503 = vpop.permute.xlu0 %1502
      %1504 = vrot.lane.b32.xlu0 %v1485, 109
      %v1505 = vpop.permute.xlu0 %1504
      %1506 = vrot.lane.b32.xlu0 %v1486, 109
      %v1507 = vpop.permute.xlu0 %1506
      %1508 = vrot.lane.b32.xlu0 %v1487, 109
      %v1509 = vpop.permute.xlu0 %1508
      %1510 = vrot.lane.b32.xlu0 %v1488, 109
      %v1511 = vpop.permute.xlu0 %1510
      %1512 = vrot.lane.b32.xlu0 %v1489, 109
      %v1513 = vpop.permute.xlu0 %1512
      %v1514 = vsel %vm954, %v1499, %v1501
      %v1515 = vsel %vm954, %v1501, %v1503
      %v1516 = vsel %vm954, %v1503, %v1505
      %v1517 = vsel %vm954, %v1507, %v1509
      %v1518 = vsel %vm954, %v1509, %v1511
      %v1519 = vsel %vm954, %v1511, %v1513
      %1526 = vst [vmem:[#allocation4 + $0x180] sm:$0xff] %v1514
      %1527 = vst [vmem:[#allocation4 + $0x188] sm:$0xff] %v1515
      %1528 = vst [vmem:[#allocation4 + $0x190] sm:$0xff] %v1516
      %1529 = vst [vmem:[#allocation4 + $0x198] sm:$0xff] %v1517
      %1530 = vst [vmem:[#allocation4 + $0x1a0] sm:$0xff] %v1518
      %1531 = vst [vmem:[#allocation4 + $0x1a8] sm:$0xff] %v1519
      %v1532 = vld [vmem:[%s5] sm:$0xff]
      %v1533 = vld [vmem:[%s5 + $0x8] sm:$0xff]
      %v1534 = vld [vmem:[#allocation4] sm:$0xff]
      %v1535 = vld [vmem:[#allocation4 + $0x8] sm:$0xff]
      %v1536 = vld [vmem:[#allocation4 + $0x10] sm:$0xff]
      %v1537 = vld [vmem:[#allocation4 + $0x18] sm:$0xff]
      %v1538 = vld [vmem:[#allocation4 + $0x20] sm:$0xff]
      %v1539 = vld [vmem:[#allocation4 + $0x28] sm:$0xff]
      %v1540 = vld [vmem:[#allocation4 + $0x30] sm:$0xff]
      %v1541 = vld [vmem:[#allocation4 + $0x38] sm:$0xff]
      %v1542 = vld [vmem:[#allocation4 + $0x40] sm:$0xff]
      %v1543 = vld [vmem:[#allocation4 + $0x48] sm:$0xff]
      %v1544 = vld [vmem:[#allocation4 + $0x50] sm:$0xff]
      %v1545 = vld [vmem:[#allocation4 + $0x58] sm:$0xff]
      %v1546 = vld [vmem:[#allocation4 + $0x60] sm:$0xff]
      %v1547 = vld [vmem:[#allocation4 + $0x68] sm:$0xff]
      %v1548 = vld [vmem:[#allocation4 + $0x70] sm:$0xff]
      %v1549 = vld [vmem:[#allocation4 + $0x78] sm:$0xff]
      %v1550 = vld [vmem:[#allocation4 + $0x80] sm:$0xff]
      %v1551 = vld [vmem:[#allocation4 + $0x88] sm:$0xff]
      %v1552 = vld [vmem:[#allocation4 + $0x90] sm:$0xff]
      %v1553 = vld [vmem:[#allocation4 + $0x98] sm:$0xff]
      %v1554 = vld [vmem:[#allocation4 + $0xa0] sm:$0xff]
      %v1555 = vld [vmem:[#allocation4 + $0xa8] sm:$0xff]
      %v1556 = vld [vmem:[#allocation4 + $0xb0] sm:$0xff]
      %v1557 = vld [vmem:[#allocation4 + $0xb8] sm:$0xff]
      %v1558 = vld [vmem:[#allocation4 + $0xc0] sm:$0xff]
      %v1559 = vld [vmem:[#allocation4 + $0xc8] sm:$0xff]
      %v1560 = vld [vmem:[#allocation4 + $0xd0] sm:$0xff]
      %v1561 = vld [vmem:[#allocation4 + $0xd8] sm:$0xff]
      %v1562 = vld [vmem:[#allocation4 + $0xe0] sm:$0xff]
      %v1563 = vld [vmem:[#allocation4 + $0xe8] sm:$0xff]
      %v1564 = vld [vmem:[#allocation4 + $0xf0] sm:$0xff]
      %v1565 = vld [vmem:[#allocation4 + $0xf8] sm:$0xff]
      %v1566 = vld [vmem:[#allocation4 + $0x100] sm:$0xff]
      %v1567 = vld [vmem:[#allocation4 + $0x108] sm:$0xff]
      %v1568 = vld [vmem:[#allocation4 + $0x110] sm:$0xff]
      %v1569 = vld [vmem:[#allocation4 + $0x118] sm:$0xff]
      %v1570 = vld [vmem:[#allocation4 + $0x120] sm:$0xff]
      %v1571 = vld [vmem:[#allocation4 + $0x128] sm:$0xff]
      %v1572 = vld [vmem:[#allocation4 + $0x130] sm:$0xff]
      %v1573 = vld [vmem:[#allocation4 + $0x138] sm:$0xff]
      %v1574 = vld [vmem:[#allocation4 + $0x140] sm:$0xff]
      %v1575 = vld [vmem:[#allocation4 + $0x148] sm:$0xff]
      %v1576 = vld [vmem:[#allocation4 + $0x150] sm:$0xff]
      %v1577 = vld [vmem:[#allocation4 + $0x158] sm:$0xff]
      %v1578 = vld [vmem:[#allocation4 + $0x160] sm:$0xff]
      %v1579 = vld [vmem:[#allocation4 + $0x168] sm:$0xff]
      %v1580 = vld [vmem:[#allocation4 + $0x170] sm:$0xff]
      %v1581 = vld [vmem:[#allocation4 + $0x178] sm:$0xff]
      %v1582 = vld [vmem:[#allocation4 + $0x180] sm:$0xff]
      %v1583 = vld [vmem:[#allocation4 + $0x188] sm:$0xff]
      %v1584 = vld [vmem:[#allocation4 + $0x190] sm:$0xff]
      %v1585 = vld [vmem:[#allocation4 + $0x198] sm:$0xff]
      %v1586 = vld [vmem:[#allocation4 + $0x1a0] sm:$0xff]
      %v1587 = vld [vmem:[#allocation4 + $0x1a8] sm:$0xff]
      %v1588 = vpack.c.bf16 %v1537, %v1534
      %v1589 = vpack.c.bf16 %v1538, %v1535
      %v1590 = vpack.c.bf16 %v1539, %v1536
      %v1591 = vpack.c.bf16 %v1543, %v1540
      %v1592 = vpack.c.bf16 %v1544, %v1541
      %v1593 = vpack.c.bf16 %v1545, %v1542
      %v1594 = vpack.c.bf16 %v1549, %v1546
      %v1595 = vpack.c.bf16 %v1550, %v1547
      %v1596 = vpack.c.bf16 %v1551, %v1548
      %v1597 = vpack.c.bf16 %v1555, %v1552
      %v1598 = vpack.c.bf16 %v1556, %v1553
      %v1599 = vpack.c.bf16 %v1557, %v1554
      %v1600 = vpack.c.bf16 %v1561, %v1558
      %v1601 = vpack.c.bf16 %v1562, %v1559
      %v1602 = vpack.c.bf16 %v1563, %v1560
      %v1603 = vpack.c.bf16 %v1567, %v1564
      %v1604 = vpack.c.bf16 %v1568, %v1565
      %v1605 = vpack.c.bf16 %v1569, %v1566
      %v1606 = vpack.c.bf16 %v1573, %v1570
      %v1607 = vpack.c.bf16 %v1574, %v1571
      %v1608 = vpack.c.bf16 %v1575, %v1572
      %v1609 = vpack.c.bf16 %v1579, %v1576
      %v1610 = vpack.c.bf16 %v1580, %v1577
      %v1611 = vpack.c.bf16 %v1581, %v1578
      %v1612 = vpack.c.bf16 %v1585, %v1582
      %v1613 = vpack.c.bf16 %v1586, %v1583
      %v1614 = vpack.c.bf16 %v1587, %v1584
      %v1615 = vld [vmem:[%s6] sm:$0xff]
      %v1616 = vld [vmem:[%s6 + $0x8] sm:$0xff]
      %1618 = vset.pattern.permute.xlu0 0
      %1619 = vperm.xlu0 %1618, %v1615
      %v1620 = vpop.permute.xlu0 %1619
      %1623 = vset.pattern.permute.xlu0 0
      %1624 = vperm.xlu0 %1623, %v1616
      %v1625 = vpop.permute.xlu0 %1624
      %v1629 = vunpack.c.l.b16 %v1532
      %v1630 = vunpack.c.h.b16 %v1532
      %v1631 = vunpack.c.l.b16 %v1533
      %v1632 = vunpack.c.h.b16 %v1533
      %v1633 = vpack.c.b16 %v1631, %v1629
      %v1634 = vpack.c.b16 %v1632, %v1630
      %vm1636 = vcmask 130048
      %v1638 = vsel %vm1636, %v1634, 0
      %1640 = vmatpush.bf16.msra.mxu0 %v1609
      %1641 = vmatpush.bf16.msra.mxu0 %v1606
      %1642 = vmatpush.bf16.msra.mxu0 %v1603
      %1643 = vmatpush.bf16.msra.mxu0 %v1600
      %1644 = vmatpush.bf16.msra.mxu0 %v1597
      %1645 = vmatpush.bf16.msra.mxu0 %v1594
      %1646 = vmatpush.bf16.msra.mxu0 %v1591
      %1647 = vmatpush.bf16.msra.mxu0 %v1588
      %1648 = vmatmul.bf16.gmra.mxu0 %v1633
      %v1649 = vpop.f32.mrf.mxu0
      %v1650 = vadd.f32 %v1620, %v1649
      %v1651 = vpop.f32.mrf.mxu0
      %v1652 = vadd.f32 %v1625, %v1651
      %1653 = vdwg.mxu0
      %1654 = vmatpush.bf16.msra.mxu0 0
      %1655 = vmatpush.bf16.msra.mxu0 0
      %1656 = vmatpush.bf16.msra.mxu0 0
      %1657 = vmatpush.bf16.msra.mxu0 0
      %1658 = vmatpush.bf16.msra.mxu0 0
      %1659 = vmatpush.bf16.msra.mxu0 0
      %1660 = vmatpush.bf16.msra.mxu0 0
      %1661 = vmatpush.bf16.msra.mxu0 %v1612
      %1662 = vmatmul.bf16.gmra.mxu0 %v1638
      %v1663 = vpop.f32.mrf.mxu0
      %v1664 = vadd.f32 %v1650, %v1663
      %v1665 = vpop.f32.mrf.mxu0
      %v1666 = vadd.f32 %v1652, %v1665
      %1667 = vdwg.mxu0
      %1668 = vmatpush.bf16.msra.mxu0 %v1610
      %1669 = vmatpush.bf16.msra.mxu0 %v1607
      %1670 = vmatpush.bf16.msra.mxu0 %v1604
      %1671 = vmatpush.bf16.msra.mxu0 %v1601
      %1672 = vmatpush.bf16.msra.mxu0 %v1598
      %1673 = vmatpush.bf16.msra.mxu0 %v1595
      %1674 = vmatpush.bf16.msra.mxu0 %v1592
      %1675 = vmatpush.bf16.msra.mxu0 %v1589
      %1676 = vmatmul.bf16.gmra.mxu0 %v1633
      %v1677 = vpop.f32.mrf.mxu0
      %v1678 = vadd.f32 %v1620, %v1677
      %v1679 = vpop.f32.mrf.mxu0
      %v1680 = vadd.f32 %v1625, %v1679
      %1681 = vdwg.mxu0
      %1682 = vmatpush.bf16.msra.mxu0 0
      %1683 = vmatpush.bf16.msra.mxu0 0
      %1684 = vmatpush.bf16.msra.mxu0 0
      %1685 = vmatpush.bf16.msra.mxu0 0
      %1686 = vmatpush.bf16.msra.mxu0 0
      %1687 = vmatpush.bf16.msra.mxu0 0
      %1688 = vmatpush.bf16.msra.mxu0 0
      %1689 = vmatpush.bf16.msra.mxu0 %v1613
      %1690 = vmatmul.bf16.gmra.mxu0 %v1638
      %v1691 = vpop.f32.mrf.mxu0
      %v1692 = vadd.f32 %v1678, %v1691
      %v1693 = vpop.f32.mrf.mxu0
      %v1694 = vadd.f32 %v1680, %v1693
      %1695 = vdwg.mxu0
      %1696 = vmatpush.bf16.msra.mxu0 %v1611
      %1697 = vmatpush.bf16.msra.mxu0 %v1608
      %1698 = vmatpush.bf16.msra.mxu0 %v1605
      %1699 = vmatpush.bf16.msra.mxu0 %v1602
      %1700 = vmatpush.bf16.msra.mxu0 %v1599
      %1701 = vmatpush.bf16.msra.mxu0 %v1596
      %1702 = vmatpush.bf16.msra.mxu0 %v1593
      %1703 = vmatpush.bf16.msra.mxu0 %v1590
      %1704 = vmatmul.bf16.gmra.mxu0 %v1633
      %v1705 = vpop.f32.mrf.mxu0
      %v1706 = vadd.f32 %v1620, %v1705
      %v1707 = vpop.f32.mrf.mxu0
      %v1708 = vadd.f32 %v1625, %v1707
      %1709 = vdwg.mxu0
      %1710 = vmatpush.bf16.msra.mxu0 0
      %1711 = vmatpush.bf16.msra.mxu0 0
      %1712 = vmatpush.bf16.msra.mxu0 0
      %1713 = vmatpush.bf16.msra.mxu0 0
      %1714 = vmatpush.bf16.msra.mxu0 0
      %1715 = vmatpush.bf16.msra.mxu0 0
      %1716 = vmatpush.bf16.msra.mxu0 0
      %1717 = vmatpush.bf16.msra.mxu0 %v1614
      %1718 = vmatmul.bf16.gmra.mxu0 %v1638
      %v1719 = vpop.f32.mrf.mxu0
      %v1720 = vadd.f32 %v1706, %v1719
      %v1721 = vpop.f32.mrf.mxu0
      %v1722 = vadd.f32 %v1708, %v1721
      %1723 = vdwg.mxu0
      %v1724 = vmax.f32 %v1664, 0.0
      %v1725 = vmax.f32 %v1692, 0.0
      %v1726 = vmax.f32 %v1720, 0.0
      %v1727 = vmax.f32 %v1666, 0.0
      %v1728 = vmax.f32 %v1694, 0.0
      %v1729 = vmax.f32 %v1722, 0.0
      %1730 = vst [vmem:[%s332 + $0x18] sm:$0xff] %v1724
      %1731 = vst [vmem:[%s332 + $0x20] sm:$0xff] %v1725
      %1732 = vst [vmem:[%s332 + $0x28] sm:$0xff] %v1726
      %v1733 = vsel %vm750, %v1727, 0.0
      %v1734 = vsel %vm751, %v1728, 0.0
      %v1735 = vsel %vm752, %v1729, 0.0
      %1736 = vst [vmem:[#allocation3 + $0x8] sm:$0xff] %v1733
      %1737 = vst [vmem:[#allocation3 + $0x10] sm:$0xff] %v1734
      %1738 = vst [vmem:[#allocation3 + $0x18] sm:$0xff] %v1735
      %v1739 = vld [vmem:[#allocation3] sm:$0xff]
      %v1740 = vld [vmem:[#allocation3 + $0x8] sm:$0xff]
      %v1741 = vld [vmem:[#allocation3 + $0x10] sm:$0xff]
      %v1742 = vld [vmem:[#allocation3 + $0x18] sm:$0xff]
      %1747 = vrot.lane.b32.xlu0 %v1739, 19
      %v1748 = vpop.permute.xlu0 %1747
      %1749 = vrot.lane.b32.xlu0 %v1740, 19
      %v1750 = vpop.permute.xlu0 %1749
      %1751 = vrot.lane.b32.xlu0 %v1741, 19
      %v1752 = vpop.permute.xlu0 %1751
      %1753 = vrot.lane.b32.xlu0 %v1742, 19
      %v1754 = vpop.permute.xlu0 %1753
      %v1755 = vsel %vm1039, %v1748, %v1750
      %v1756 = vsel %vm1039, %v1750, %v1752
      %v1757 = vsel %vm1039, %v1752, %v1754
      %1761 = vst [vmem:[#allocation4] sm:$0xff] %v1755
      %1762 = vst [vmem:[#allocation4 + $0x8] sm:$0xff] %v1756
      %1763 = vst [vmem:[#allocation4 + $0x10] sm:$0xff] %v1757
      %v1764 = vld [vmem:[#allocation3] sm:$0xff]
      %v1765 = vld [vmem:[#allocation3 + $0x8] sm:$0xff]
      %v1766 = vld [vmem:[#allocation3 + $0x10] sm:$0xff]
      %v1767 = vld [vmem:[#allocation3 + $0x18] sm:$0xff]
      %1772 = vrot.lane.b32.xlu0 %v1764, 18
      %v1773 = vpop.permute.xlu0 %1772
      %1774 = vrot.lane.b32.xlu0 %v1765, 18
      %v1775 = vpop.permute.xlu0 %1774
      %1776 = vrot.lane.b32.xlu0 %v1766, 18
      %v1777 = vpop.permute.xlu0 %1776
      %1778 = vrot.lane.b32.xlu0 %v1767, 18
      %v1779 = vpop.permute.xlu0 %1778
      %v1780 = vsel %vm1198, %v1773, %v1775
      %v1781 = vsel %vm1198, %v1775, %v1777
      %v1782 = vsel %vm1198, %v1777, %v1779
      %1786 = vst [vmem:[#allocation4 + $0x18] sm:$0xff] %v1780
      %1787 = vst [vmem:[#allocation4 + $0x20] sm:$0xff] %v1781
      %1788 = vst [vmem:[#allocation4 + $0x28] sm:$0xff] %v1782
      %v1789 = vld [vmem:[#allocation3] sm:$0xff]
      %v1790 = vld [vmem:[#allocation3 + $0x8] sm:$0xff]
      %v1791 = vld [vmem:[#allocation3 + $0x10] sm:$0xff]
      %v1792 = vld [vmem:[#allocation3 + $0x18] sm:$0xff]
      %1797 = vrot.lane.b32.xlu0 %v1789, 17
      %v1798 = vpop.permute.xlu0 %1797
      %1799 = vrot.lane.b32.xlu0 %v1790, 17
      %v1800 = vpop.permute.xlu0 %1799
      %1801 = vrot.lane.b32.xlu0 %v1791, 17
      %v1802 = vpop.permute.xlu0 %1801
      %1803 = vrot.lane.b32.xlu0 %v1792, 17
      %v1804 = vpop.permute.xlu0 %1803
      %v1805 = vsel %vm1249, %v1798, %v1800
      %v1806 = vsel %vm1249, %v1800, %v1802
      %v1807 = vsel %vm1249, %v1802, %v1804
      %1811 = vst [vmem:[#allocation4 + $0x30] sm:$0xff] %v1805
      %1812 = vst [vmem:[#allocation4 + $0x38] sm:$0xff] %v1806
      %1813 = vst [vmem:[#allocation4 + $0x40] sm:$0xff] %v1807
      %v1814 = vld [vmem:[#allocation3] sm:$0xff]
      %v1815 = vld [vmem:[#allocation3 + $0x8] sm:$0xff]
      %v1816 = vld [vmem:[#allocation3 + $0x10] sm:$0xff]
      %v1817 = vld [vmem:[#allocation3 + $0x18] sm:$0xff]
      %1822 = vrot.lane.b32.xlu0 %v1814, 1
      %v1823 = vpop.permute.xlu0 %1822
      %1824 = vrot.lane.b32.xlu0 %v1815, 1
      %v1825 = vpop.permute.xlu0 %1824
      %1826 = vrot.lane.b32.xlu0 %v1816, 1
      %v1827 = vpop.permute.xlu0 %1826
      %1828 = vrot.lane.b32.xlu0 %v1817, 1
      %v1829 = vpop.permute.xlu0 %1828
      %v1830 = vsel %vm1300, %v1823, %v1825
      %v1831 = vsel %vm1300, %v1825, %v1827
      %v1832 = vsel %vm1300, %v1827, %v1829
      %1836 = vst [vmem:[#allocation4 + $0x48] sm:$0xff] %v1830
      %1837 = vst [vmem:[#allocation4 + $0x50] sm:$0xff] %v1831
      %1838 = vst [vmem:[#allocation4 + $0x58] sm:$0xff] %v1832
      %v1839 = vld [vmem:[#allocation3 + $0x8] sm:$0xff]
      %v1840 = vld [vmem:[#allocation3 + $0x10] sm:$0xff]
      %v1841 = vld [vmem:[#allocation3 + $0x18] sm:$0xff]
      %1842 = vst [vmem:[#allocation4 + $0x60] sm:$0xff] %v1839
      %1843 = vst [vmem:[#allocation4 + $0x68] sm:$0xff] %v1840
      %1844 = vst [vmem:[#allocation4 + $0x70] sm:$0xff] %v1841
      %v1845 = vld [vmem:[#allocation3 + $0x8] sm:$0xff]
      %v1846 = vld [vmem:[#allocation3 + $0x10] sm:$0xff]
      %v1847 = vld [vmem:[#allocation3 + $0x18] sm:$0xff]
      %v1848 = vld [vmem:[#allocation3 + $0x20] sm:$0xff]
      %1853 = vrot.lane.b32.xlu0 %v1845, 127
      %v1854 = vpop.permute.xlu0 %1853
      %1855 = vrot.lane.b32.xlu0 %v1846, 127
      %v1856 = vpop.permute.xlu0 %1855
      %1857 = vrot.lane.b32.xlu0 %v1847, 127
      %v1858 = vpop.permute.xlu0 %1857
      %1859 = vrot.lane.b32.xlu0 %v1848, 127
      %v1860 = vpop.permute.xlu0 %1859
      %v1861 = vsel %vm495, %v1854, %v1856
      %v1862 = vsel %vm495, %v1856, %v1858
      %v1863 = vsel %vm495, %v1858, %v1860
      %1867 = vst [vmem:[#allocation4 + $0x78] sm:$0xff] %v1861
      %1868 = vst [vmem:[#allocation4 + $0x80] sm:$0xff] %v1862
      %1869 = vst [vmem:[#allocation4 + $0x88] sm:$0xff] %v1863
      %v1870 = vld [vmem:[#allocation3 + $0x8] sm:$0xff]
      %v1871 = vld [vmem:[#allocation3 + $0x10] sm:$0xff]
      %v1872 = vld [vmem:[#allocation3 + $0x18] sm:$0xff]
      %v1873 = vld [vmem:[#allocation3 + $0x20] sm:$0xff]
      %1878 = vrot.lane.b32.xlu0 %v1870, 111
      %v1879 = vpop.permute.xlu0 %1878
      %1880 = vrot.lane.b32.xlu0 %v1871, 111
      %v1881 = vpop.permute.xlu0 %1880
      %1882 = vrot.lane.b32.xlu0 %v1872, 111
      %v1883 = vpop.permute.xlu0 %1882
      %1884 = vrot.lane.b32.xlu0 %v1873, 111
      %v1885 = vpop.permute.xlu0 %1884
      %v1886 = vsel %vm1413, %v1879, %v1881
      %v1887 = vsel %vm1413, %v1881, %v1883
      %v1888 = vsel %vm1413, %v1883, %v1885
      %1892 = vst [vmem:[#allocation4 + $0x90] sm:$0xff] %v1886
      %1893 = vst [vmem:[#allocation4 + $0x98] sm:$0xff] %v1887
      %1894 = vst [vmem:[#allocation4 + $0xa0] sm:$0xff] %v1888
      %v1895 = vld [vmem:[#allocation3 + $0x8] sm:$0xff]
      %v1896 = vld [vmem:[#allocation3 + $0x10] sm:$0xff]
      %v1897 = vld [vmem:[#allocation3 + $0x18] sm:$0xff]
      %v1898 = vld [vmem:[#allocation3 + $0x20] sm:$0xff]
      %1903 = vrot.lane.b32.xlu0 %v1895, 110
      %v1904 = vpop.permute.xlu0 %1903
      %1905 = vrot.lane.b32.xlu0 %v1896, 110
      %v1906 = vpop.permute.xlu0 %1905
      %1907 = vrot.lane.b32.xlu0 %v1897, 110
      %v1908 = vpop.permute.xlu0 %1907
      %1909 = vrot.lane.b32.xlu0 %v1898, 110
      %v1910 = vpop.permute.xlu0 %1909
      %v1911 = vsel %vm937, %v1904, %v1906
      %v1912 = vsel %vm937, %v1906, %v1908
      %v1913 = vsel %vm937, %v1908, %v1910
      %1917 = vst [vmem:[#allocation4 + $0xa8] sm:$0xff] %v1911
      %1918 = vst [vmem:[#allocation4 + $0xb0] sm:$0xff] %v1912
      %1919 = vst [vmem:[#allocation4 + $0xb8] sm:$0xff] %v1913
      %v1920 = vld [vmem:[#allocation3 + $0x8] sm:$0xff]
      %v1921 = vld [vmem:[#allocation3 + $0x10] sm:$0xff]
      %v1922 = vld [vmem:[#allocation3 + $0x18] sm:$0xff]
      %v1923 = vld [vmem:[#allocation3 + $0x20] sm:$0xff]
      %1928 = vrot.lane.b32.xlu0 %v1920, 109
      %v1929 = vpop.permute.xlu0 %1928
      %1930 = vrot.lane.b32.xlu0 %v1921, 109
      %v1931 = vpop.permute.xlu0 %1930
      %1932 = vrot.lane.b32.xlu0 %v1922, 109
      %v1933 = vpop.permute.xlu0 %1932
      %1934 = vrot.lane.b32.xlu0 %v1923, 109
      %v1935 = vpop.permute.xlu0 %1934
      %v1936 = vsel %vm954, %v1929, %v1931
      %v1937 = vsel %vm954, %v1931, %v1933
      %v1938 = vsel %vm954, %v1933, %v1935
      %1942 = vst [vmem:[#allocation4 + $0xc0] sm:$0xff] %v1936
      %1943 = vst [vmem:[#allocation4 + $0xc8] sm:$0xff] %v1937
      %1944 = vst [vmem:[#allocation4 + $0xd0] sm:$0xff] %v1938
      %v1945 = vld [vmem:[%s7] sm:$0xf]
      %v1946 = vld [vmem:[#allocation4] sm:$0xff]
      %v1947 = vld [vmem:[#allocation4 + $0x8] sm:$0xff]
      %v1948 = vld [vmem:[#allocation4 + $0x10] sm:$0xff]
      %v1949 = vld [vmem:[#allocation4 + $0x18] sm:$0xff]
      %v1950 = vld [vmem:[#allocation4 + $0x20] sm:$0xff]
      %v1951 = vld [vmem:[#allocation4 + $0x28] sm:$0xff]
      %v1952 = vld [vmem:[#allocation4 + $0x30] sm:$0xff]
      %v1953 = vld [vmem:[#allocation4 + $0x38] sm:$0xff]
      %v1954 = vld [vmem:[#allocation4 + $0x40] sm:$0xff]
      %v1955 = vld [vmem:[#allocation4 + $0x48] sm:$0xff]
      %v1956 = vld [vmem:[#allocation4 + $0x50] sm:$0xff]
      %v1957 = vld [vmem:[#allocation4 + $0x58] sm:$0xff]
      %v1958 = vld [vmem:[#allocation4 + $0x60] sm:$0xff]
      %v1959 = vld [vmem:[#allocation4 + $0x68] sm:$0xff]
      %v1960 = vld [vmem:[#allocation4 + $0x70] sm:$0xff]
      %v1961 = vld [vmem:[#allocation4 + $0x78] sm:$0xff]
      %v1962 = vld [vmem:[#allocation4 + $0x80] sm:$0xff]
      %v1963 = vld [vmem:[#allocation4 + $0x88] sm:$0xff]
      %v1964 = vld [vmem:[#allocation4 + $0x90] sm:$0xff]
      %v1965 = vld [vmem:[#allocation4 + $0x98] sm:$0xff]
      %v1966 = vld [vmem:[#allocation4 + $0xa0] sm:$0xff]
      %v1967 = vld [vmem:[#allocation4 + $0xa8] sm:$0xff]
      %v1968 = vld [vmem:[#allocation4 + $0xb0] sm:$0xff]
      %v1969 = vld [vmem:[#allocation4 + $0xb8] sm:$0xff]
      %v1970 = vld [vmem:[#allocation4 + $0xc0] sm:$0xff]
      %v1971 = vld [vmem:[#allocation4 + $0xc8] sm:$0xff]
      %v1972 = vld [vmem:[#allocation4 + $0xd0] sm:$0xff]
      %v1973 = vpack.c.bf16 %v1949, %v1946
      %v1974 = vpack.c.bf16 %v1950, %v1947
      %v1975 = vpack.c.bf16 %v1951, %v1948
      %v1976 = vpack.c.bf16 %v1955, %v1952
      %v1977 = vpack.c.bf16 %v1956, %v1953
      %v1978 = vpack.c.bf16 %v1957, %v1954
      %v1979 = vpack.c.bf16 %v1961, %v1958
      %v1980 = vpack.c.bf16 %v1962, %v1959
      %v1981 = vpack.c.bf16 %v1963, %v1960
      %v1982 = vpack.c.bf16 %v1967, %v1964
      %v1983 = vpack.c.bf16 %v1968, %v1965
      %v1984 = vpack.c.bf16 %v1969, %v1966
      %v1985 = vpack.c.bf16 %v1970, %v1970
      %v1986 = vpack.c.bf16 %v1971, %v1971
      %v1987 = vpack.c.bf16 %v1972, %v1972
      %v1988 = vld [vmem:[%s8] sm:$0xff]
      %1990 = vset.pattern.permute.xlu0 0
      %1991 = vperm.xlu0 %1990, %v1988
      %v1992 = vpop.permute.xlu0 %1991
      %vm1994 = vcmask 588800
      %v1996 = vsel %vm1994, %v1945, 0
      %v1999 = vsel %vm908, %v1985, 0
      %v2002 = vsel %vm908, %v1986, 0
      %v2005 = vsel %vm908, %v1987, 0
      %2007 = vmatpush.bf16.msra.mxu0 0
      %2008 = vmatpush.bf16.msra.mxu0 0
      %2009 = vmatpush.bf16.msra.mxu0 0
      %2010 = vmatpush.bf16.msra.mxu0 %v1999
      %2011 = vmatpush.bf16.msra.mxu0 %v1982
      %2012 = vmatpush.bf16.msra.mxu0 %v1979
      %2013 = vmatpush.bf16.msra.mxu0 %v1976
      %2014 = vmatpush.bf16.msra.mxu0 %v1973
      %2015 = vmatmul.bf16.gmra.mxu0 %v1996
      %v2016 = vpop.f32.mrf.mxu0
      %v2017 = vadd.f32 %v1992, %v2016
      %v2018 = vpop.f32.mrf.mxu0
      %2019 = vdwg.mxu0
      %2020 = vmatpush.bf16.msra.mxu0 0
      %2021 = vmatpush.bf16.msra.mxu0 0
      %2022 = vmatpush.bf16.msra.mxu0 0
      %2023 = vmatpush.bf16.msra.mxu0 %v2002
      %2024 = vmatpush.bf16.msra.mxu0 %v1983
      %2025 = vmatpush.bf16.msra.mxu0 %v1980
      %2026 = vmatpush.bf16.msra.mxu0 %v1977
      %2027 = vmatpush.bf16.msra.mxu0 %v1974
      %2028 = vmatmul.bf16.gmra.mxu0 %v1996
      %v2029 = vpop.f32.mrf.mxu0
      %v2030 = vadd.f32 %v1992, %v2029
      %v2031 = vpop.f32.mrf.mxu0
      %2032 = vdwg.mxu0
      %2033 = vmatpush.bf16.msra.mxu0 0
      %2034 = vmatpush.bf16.msra.mxu0 0
      %2035 = vmatpush.bf16.msra.mxu0 0
      %2036 = vmatpush.bf16.msra.mxu0 %v2005
      %2037 = vmatpush.bf16.msra.mxu0 %v1984
      %2038 = vmatpush.bf16.msra.mxu0 %v1981
      %2039 = vmatpush.bf16.msra.mxu0 %v1978
      %2040 = vmatpush.bf16.msra.mxu0 %v1975
      %2041 = vmatmul.bf16.gmra.mxu0 %v1996
      %v2042 = vpop.f32.mrf.mxu0
      %v2043 = vadd.f32 %v1992, %v2042
      %v2044 = vpop.f32.mrf.mxu0
      %2045 = vdwg.mxu0
      %v2046 = vmax.f32 %v2017, 0.0
      %v2047 = vmax.f32 %v2030, 0.0
      %v2048 = vmax.f32 %v2043, 0.0
      %2049 = vst [vmem:[%s332 + $0x30] sm:$0xff] %v2046
      %2050 = vst [vmem:[%s332 + $0x38] sm:$0xff] %v2047
      %2051 = vst [vmem:[%s332 + $0x40] sm:$0xff] %v2048
      %p2052 = scmp.lt.s32.totalorder %s20, 1
      %s2053 = scalar_select %p2052, %s20, 1
      %s2054 = smul.addr %s2053, 12
      %s2055 = smul.addr %s2054, 8
      %s2056 = scalar_lea.vmem %s9, %s2055
      // Predicated region
      $region57: #{_inception_forward.1} parent=55 // pred_check
        %p2057 = pneg %p232
      $region58: #{_inception_forward.1} parent=55 // pred_check_branch
        %2059 = sbr.rel (%p2057) target = $region60
      $region59: #{_inception_forward.1} parent=55 // pred_region
        _
      $region60: #{_inception_forward.1} parent=55 // pred_fallthru
        _
    $region56: #{_inception_forward.1} parent=5 // pred_fallthru
      _
    %p2060 = scmp.le.s32.totalorder 2, %s15
    // Predicated region
    $region61: #{_inception_forward.1} parent=5 // pred_check
      %p2061 = pneg %p2060
    $region62: #{_inception_forward.1} parent=5 // pred_check_branch
      %2063 = sbr.rel (%p2061) target = $region64
    $region63: #{_inception_forward.1} parent=5 // pred_region
      %s2064 = ssub.s32 %s15, 2
      // Predicated region
      $region65: #{_inception_forward.1} parent=63 // pred_check
        %p2065 = pneg %p238
      $region66: #{_inception_forward.1} parent=63 // pred_check_branch
        %2067 = sbr.rel (%p2065) target = $region68
      $region67: #{_inception_forward.1} parent=63 // pred_region
        %p2068 = scmp.lt.s32.totalorder %s21, 1
        %s2069 = scalar_select %p2068, %s21, 1
        %s2070 = smul.addr %s2069, 12
        %s2071 = smul.addr %s2070, 8
        %s2072 = scalar_lea.vmem %s9, %s2071
      $region68: #{_inception_forward.1} parent=63 // pred_fallthru
        _
    $region64: #{_inception_forward.1} parent=5 // pred_fallthru
      _
  $region6: #{_inception_forward.1} parent=0 // loop_footer
    %s19 = sadd.s32 1, %s15
  $region7: #{_inception_forward.1} parent=0 // loop_footer_branch
    %14 = sbr.rel target = $region3
  $region8: #{_inception_forward.1} parent=0 // loop_exit
    _

</llo_original>
